<compile_context>
chip_gen: v7x
topology: tpu7x:2x2x1
jax: 0.10.0
libtpu: 0.0.40
codegen_flags: <defaults>
</compile_context>

<pallas_src>
import functools

import jax
import jax.numpy as jnp
from jax import lax
from jax.experimental import pallas as pl
from jax.experimental.pallas import tpu as pltpu


def _round_up(x, m):
    return (x + m - 1) // m * m


# ----------------------------- Pallas kernel ------------------------------ #
def _gemm_bn_act_kernel(x_ref, w_ref, s_ref, t_ref, o_ref, acc_ref, *, relu):
    """acc += X @ W (f32 acc); last k-step: out = act(acc * scale + shift)."""
    k = pl.program_id(2)

    @pl.when(k == 0)
    def _():
        acc_ref[...] = jnp.zeros_like(acc_ref)

    acc_ref[...] += jnp.dot(x_ref[...], w_ref[...],
                            preferred_element_type=jnp.float32)

    @pl.when(k == pl.num_programs(2) - 1)
    def _():
        y = acc_ref[...] * s_ref[...] + t_ref[...]   # folded conv-bias + BN (eval)
        if relu:
            y = jnp.maximum(y, 0.0)
        o_ref[...] = y.astype(o_ref.dtype)


def fused_matmul(x, w, scale, shift, *, relu, out_dtype):
    """out[:m,:n] = act(scale * (x @ w) + shift); bf16 operands, f32 accumulate."""
    m, k = x.shape
    k2, n = w.shape
    assert k == k2

    # ---- layer-shape-aware tiles ------------------------------------------
    if m >= 1024:
        tm = 512
    elif m >= 256:
        tm = 256                      # keeps the parallel M axis >= 2 when possible
    elif m >= 128:
        tm = 128
    else:
        tm = _round_up(m, 16)         # bf16 sublane packing
    mp = _round_up(m, tm)

    if n <= 128:
        tn, np_ = n, n                # full-N block: no zero columns, legal layout
    else:
        tn = 256 if (n % 256 == 0) else 128
        np_ = _round_up(n, tn)

    if k <= 2048:
        tk, kp = k, k                 # full-K block: single reduction step, no pad
    else:
        tk = 512
        kp = _round_up(k, tk)

    # ---- operands: bf16 for the MXU, f32 epilogue params -------------------
    xb = x.astype(jnp.bfloat16)
    wb = w.astype(jnp.bfloat16)
    if (mp, kp) != (m, k):
        xb = jnp.pad(xb, ((0, mp - m), (0, kp - k)))
    if (kp, np_) != (k, n):
        wb = jnp.pad(wb, ((0, kp - k), (0, np_ - n)))

    s2 = scale.reshape(1, -1).astype(jnp.float32)
    t2 = shift.reshape(1, -1).astype(jnp.float32)
    if np_ != n:
        s2 = jnp.pad(s2, ((0, 0), (0, np_ - n)))
        t2 = jnp.pad(t2, ((0, 0), (0, np_ - n)))

    grid = (mp // tm, np_ // tn, kp // tk)

    out = pl.pallas_call(
        functools.partial(_gemm_bn_act_kernel, relu=relu),
        out_shape=jax.ShapeDtypeStruct((mp, np_), out_dtype),
        grid_spec=pltpu.PrefetchScalarGridSpec(
            num_scalar_prefetch=0,
            grid=grid,
            in_specs=[
                pl.BlockSpec((tm, tk), lambda i, j, kk: (i, kk)),
                pl.BlockSpec((tk, tn), lambda i, j, kk: (kk, j)),
                pl.BlockSpec((1, tn), lambda i, j, kk: (0, j)),
                pl.BlockSpec((1, tn), lambda i, j, kk: (0, j)),
            ],
            out_specs=pl.BlockSpec((tm, tn), lambda i, j, kk: (i, j)),
            scratch_shapes=[pltpu.VMEM((tm, tn), jnp.float32)],
        ),
        # Tiles here are small (<~3 MB double-buffered), so the default scoped
        # VMEM limit is sufficient on v5e/v6e/v7x; no explicit vmem_limit needed.
        compiler_params=pltpu.CompilerParams(
            dimension_semantics=("parallel", "parallel", "arbitrary")),
    )(xb, wb, s2, t2)

    if (mp, np_) != (m, n):
        out = out[:m, :n]
    return out


# ------------------------------- JAX glue ---------------------------------- #
def conv3x3_bn_relu(x_nhwc, w_pt, bias, bn_scale, bn_shift, *, relu, out_dtype):
    """Conv2d(k=3, stride=1, padding='same') + folded eval-BN + ReLU.

    x_nhwc : (N, H, W, Cin)
    w_pt   : (Cout, Cin, 3, 3)  -- PyTorch weight layout
    """
    n, h, w, cin = x_nhwc.shape
    cout = w_pt.shape[0]

    xb = x_nhwc.astype(jnp.bfloat16)
    xp = jnp.pad(xb, ((0, 0), (1, 1), (1, 1), (0, 0)))
    cols = []
    for kh in range(3):
        for kw in range(3):
            cols.append(xp[:, kh:kh + h, kw:kw + w, :])
    patches = jnp.stack(cols, axis=3)                  # (N, H, W, 9, Cin)
    patches = patches.reshape(n * h * w, 9 * cin)      # row-major (kh, kw, cin)

    wmat = jnp.transpose(w_pt, (2, 3, 1, 0)).reshape(9 * cin, cout)

    # Fold conv bias into the BN shift: scale*(conv + b) + shift
    scale = bn_scale
    shift = bn_scale * bias + bn_shift

    out = fused_matmul(patches, wmat, scale, shift, relu=relu, out_dtype=out_dtype)
    return out.reshape(n, h, w, cout)


def two_conv_block_forward(x_nchw, params):
    """Matches TwoConvBlock.forward (eval-mode BN)."""
    a = jnp.transpose(x_nchw, (0, 2, 3, 1))            # NCHW -> NHWC
    p1, p2 = params
    a = conv3x3_bn_relu(a, p1["w"], p1["b"], p1["scale"], p1["shift"],
                        relu=True, out_dtype=jnp.bfloat16)
    a = conv3x3_bn_relu(a, p2["w"], p2["b"], p2["scale"], p2["shift"],
                        relu=True, out_dtype=jnp.float32)
    return jnp.transpose(a, (0, 3, 1, 2))              # NHWC -> NCHW


def init_params(key, in_channels, middle_channels, out_channels):
    eps = 1e-5
    params = []
    for cin, cout in ((in_channels, middle_channels),
                      (middle_channels, out_channels)):
        key, kw, kb, kg, kbe = jax.random.split(key, 5)
        w = jax.random.normal(kw, (cout, cin, 3, 3), jnp.float32) * 0.05
        b = jax.random.normal(kb, (cout,), jnp.float32) * 0.05
        gamma = 1.0 + 0.1 * jax.random.normal(kg, (cout,), jnp.float32)
        beta = 0.1 * jax.random.normal(kbe, (cout,), jnp.float32)
        run_mean = jnp.zeros((cout,), jnp.float32)
        run_var = jnp.ones((cout,), jnp.float32)
        scale = gamma / jnp.sqrt(run_var + eps)
        shift = beta - run_mean * scale
        params.append(dict(w=w, b=b, scale=scale, shift=shift))
    return params


def _reference_forward(x_nchw, params):
    """Pure-JAX f32 reference (lax.conv) for a sanity tolerance check."""
    def layer(x, p):
        y = lax.conv_general_dilated(
            x, p["w"], window_strides=(1, 1), padding="SAME",
            dimension_numbers=("NCHW", "OIHW", "NCHW"))
        y = y + p["b"].reshape(1, -1, 1, 1)
        y = y * p["scale"].reshape(1, -1, 1, 1) + p["shift"].reshape(1, -1, 1, 1)
        return jnp.maximum(y, 0.0)
    y = layer(x_nchw, params[0])
    return layer(y, params[1])


if __name__ == "__main__":
    key = jax.random.PRNGKey(0)
    kx, kp = jax.random.split(key)

    batch, in_c, mid_c, out_c, hw = 2, 4, 8, 4, 16
    x = jax.random.normal(kx, (batch, in_c, hw, hw), jnp.float32)   # NCHW
    params = init_params(kp, in_c, mid_c, out_c)

    fwd = jax.jit(two_conv_block_forward)
    out = jax.block_until_ready(fwd(x, params))

    assert out.shape == (batch, out_c, hw, hw), out.shape
    assert out.dtype == jnp.float32

    ref = jax.block_until_ready(_reference_forward(x, params))
    max_err = float(jnp.max(jnp.abs(out - ref)))
    assert max_err < 5e-2, f"max abs error vs reference too large: {max_err}"

    print("KERNEL_OK")
</pallas_src>

<mosaic_0001>
module attributes {stable_mosaic.version = 11 : i64} {
  func.func @_gemm_bn_act_kernel(%arg0: i32, %arg1: i32, %arg2: i32, %arg3: memref<256x36xbf16, #tpu.memory_space<vmem>>, %arg4: memref<36x8xbf16, #tpu.memory_space<vmem>>, %arg5: memref<1x8xf32, #tpu.memory_space<vmem>>, %arg6: memref<1x8xf32, #tpu.memory_space<vmem>>, %arg7: memref<256x8xbf16, #tpu.memory_space<vmem>>, %arg8: memref<256x8xf32, #tpu.memory_space<vmem>>) attributes {dimension_semantics = [#tpu.dimension_semantics<parallel>, #tpu.dimension_semantics<parallel>, #tpu.dimension_semantics<arbitrary>], iteration_bounds = array<i64: 2, 1, 1>, scalar_prefetch = 0 : i64, scratch_operands = 1 : i64, tpu.core_type = #tpu.core_type<tc>, window_params = [{transform_indices = @transform_0, window_bounds = array<i64: 256, 36>}, {transform_indices = @transform_1, window_bounds = array<i64: 36, 8>}, {transform_indices = @transform_2, window_bounds = array<i64: 1, 8>}, {transform_indices = @transform_3, window_bounds = array<i64: 1, 8>}, {transform_indices = @transform_4, window_bounds = array<i64: 256, 8>}]} {
    %c0_i32 = arith.constant 0 : i32
    %0 = arith.cmpi eq, %arg2, %c0_i32 : i32
    %1 = arith.extui %0 : i1 to i32
    %c0_i32_0 = arith.constant 0 : i32
    %2 = arith.cmpi ne, %1, %c0_i32_0 : i32
    scf.if %2 {
      %cst_10 = arith.constant 0.000000e+00 : f32
      %12 = vector.broadcast %cst_10 : f32 to vector<256x8xf32>
      %c0_11 = arith.constant 0 : index
      %c0_12 = arith.constant 0 : index
      %13 = vector.load %arg8[%c0_11, %c0_12] : memref<256x8xf32, #tpu.memory_space<vmem>>, vector<256x8xf32>
      tpu.vector_store %arg8[%c0_11, %c0_12], %12 {strides = array<i32>} : memref<256x8xf32, #tpu.memory_space<vmem>>, vector<256x8xf32>,
    } else {
    }
    %c0 = arith.constant 0 : index
    %c0_1 = arith.constant 0 : index
    %3 = vector.load %arg8[%c0, %c0_1] : memref<256x8xf32, #tpu.memory_space<vmem>>, vector<256x8xf32>
    %c0_2 = arith.constant 0 : index
    %c0_3 = arith.constant 0 : index
    %4 = vector.load %arg3[%c0_2, %c0_3] : memref<256x36xbf16, #tpu.memory_space<vmem>>, vector<256x36xbf16>
    %c0_4 = arith.constant 0 : index
    %c0_5 = arith.constant 0 : index
    %5 = vector.load %arg4[%c0_4, %c0_5] : memref<36x8xbf16, #tpu.memory_space<vmem>>, vector<36x8xbf16>
    %cst = arith.constant dense<0.000000e+00> : vector<256x8xf32>
    %6 = tpu.matmul %4, %5, %cst {dimension_numbers = #tpu.dot_dimension_numbers<[1], [0], [0], [1], [0, 0, 1, 1], [], []>} : vector<256x36xbf16>, vector<36x8xbf16>, vector<256x8xf32> -> vector<256x8xf32>
    %7 = arith.addf %3, %6 : vector<256x8xf32>
    %c0_6 = arith.constant 0 : index
    %c0_7 = arith.constant 0 : index
    %8 = vector.load %arg8[%c0_6, %c0_7] : memref<256x8xf32, #tpu.memory_space<vmem>>, vector<256x8xf32>
    tpu.vector_store %arg8[%c0_6, %c0_7], %7 {strides = array<i32>} : memref<256x8xf32, #tpu.memory_space<vmem>>, vector<256x8xf32>,
    %c0_i32_8 = arith.constant 0 : i32
    %9 = arith.cmpi eq, %arg2, %c0_i32_8 : i32
    %10 = arith.extui %9 : i1 to i32
    %c0_i32_9 = arith.constant 0 : i32
    %11 = arith.cmpi ne, %10, %c0_i32_9 : i32
    scf.if %11 {
      %c0_10 = arith.constant 0 : index
      %c0_11 = arith.constant 0 : index
      %12 = vector.load %arg8[%c0_10, %c0_11] : memref<256x8xf32, #tpu.memory_space<vmem>>, vector<256x8xf32>
      %c0_12 = arith.constant 0 : index
      %c0_13 = arith.constant 0 : index
      %13 = vector.load %arg5[%c0_12, %c0_13] : memref<1x8xf32, #tpu.memory_space<vmem>>, vector<1x8xf32>
      %14 = vector.broadcast %13 : vector<1x8xf32> to vector<256x8xf32>
      %15 = arith.mulf %12, %14 : vector<256x8xf32>
      %c0_14 = arith.constant 0 : index
      %c0_15 = arith.constant 0 : index
      %16 = vector.load %arg6[%c0_14, %c0_15] : memref<1x8xf32, #tpu.memory_space<vmem>>, vector<1x8xf32>
      %17 = vector.broadcast %16 : vector<1x8xf32> to vector<256x8xf32>
      %18 = arith.addf %15, %17 : vector<256x8xf32>
      %cst_16 = arith.constant 0.000000e+00 : f32
      %19 = vector.broadcast %cst_16 : f32 to vector<256x8xf32>
      %20 = arith.maximumf %18, %19 : vector<256x8xf32>
      %21 = arith.truncf %20 : vector<256x8xf32> to vector<256x8xbf16>
      %c0_17 = arith.constant 0 : index
      %c0_18 = arith.constant 0 : index
      %22 = vector.load %arg7[%c0_17, %c0_18] : memref<256x8xbf16, #tpu.memory_space<vmem>>, vector<256x8xbf16>
      tpu.vector_store %arg7[%c0_17, %c0_18], %21 {strides = array<i32>} : memref<256x8xbf16, #tpu.memory_space<vmem>>, vector<256x8xbf16>,
    } else {
    }
    return
  }
  func.func @transform_0(%arg0: i32, %arg1: i32, %arg2: i32) -> (i32, i32) {
    %c0_i32 = arith.constant 0 : i32
    return %arg0, %arg2 : i32, i32
  }
  func.func @transform_1(%arg0: i32, %arg1: i32, %arg2: i32) -> (i32, i32) {
    %c0_i32 = arith.constant 0 : i32
    return %arg2, %arg1 : i32, i32
  }
  func.func @transform_2(%arg0: i32, %arg1: i32, %arg2: i32) -> (i32, i32) {
    %c0_i32 = arith.constant 0 : i32
    %c0_i32_0 = arith.constant 0 : i32
    return %c0_i32, %arg1 : i32, i32
  }
  func.func @transform_3(%arg0: i32, %arg1: i32, %arg2: i32) -> (i32, i32) {
    %c0_i32 = arith.constant 0 : i32
    %c0_i32_0 = arith.constant 0 : i32
    return %c0_i32, %arg1 : i32, i32
  }
  func.func @transform_4(%arg0: i32, %arg1: i32, %arg2: i32) -> (i32, i32) {
    %c0_i32 = arith.constant 0 : i32
    return %arg0, %arg1 : i32, i32
  }
}

module attributes {stable_mosaic.version = 11 : i64} {
  func.func @_gemm_bn_act_kernel(%arg0: i32, %arg1: i32, %arg2: i32, %arg3: memref<256x72xbf16, #tpu.memory_space<vmem>>, %arg4: memref<72x4xbf16, #tpu.memory_space<vmem>>, %arg5: memref<1x4xf32, #tpu.memory_space<vmem>>, %arg6: memref<1x4xf32, #tpu.memory_space<vmem>>, %arg7: memref<256x4xf32, #tpu.memory_space<vmem>>, %arg8: memref<256x4xf32, #tpu.memory_space<vmem>>) attributes {dimension_semantics = [#tpu.dimension_semantics<parallel>, #tpu.dimension_semantics<parallel>, #tpu.dimension_semantics<arbitrary>], iteration_bounds = array<i64: 2, 1, 1>, scalar_prefetch = 0 : i64, scratch_operands = 1 : i64, tpu.core_type = #tpu.core_type<tc>, window_params = [{transform_indices = @transform_0, window_bounds = array<i64: 256, 72>}, {transform_indices = @transform_1, window_bounds = array<i64: 72, 4>}, {transform_indices = @transform_2, window_bounds = array<i64: 1, 4>}, {transform_indices = @transform_3, window_bounds = array<i64: 1, 4>}, {transform_indices = @transform_4, window_bounds = array<i64: 256, 4>}]} {
    %c0_i32 = arith.constant 0 : i32
    %0 = arith.cmpi eq, %arg2, %c0_i32 : i32
    %1 = arith.extui %0 : i1 to i32
    %c0_i32_0 = arith.constant 0 : i32
    %2 = arith.cmpi ne, %1, %c0_i32_0 : i32
    scf.if %2 {
      %cst_10 = arith.constant 0.000000e+00 : f32
      %12 = vector.broadcast %cst_10 : f32 to vector<256x4xf32>
      %c0_11 = arith.constant 0 : index
      %c0_12 = arith.constant 0 : index
      %13 = vector.load %arg8[%c0_11, %c0_12] : memref<256x4xf32, #tpu.memory_space<vmem>>, vector<256x4xf32>
      tpu.vector_store %arg8[%c0_11, %c0_12], %12 {strides = array<i32>} : memref<256x4xf32, #tpu.memory_space<vmem>>, vector<256x4xf32>,
    } else {
    }
    %c0 = arith.constant 0 : index
    %c0_1 = arith.constant 0 : index
    %3 = vector.load %arg8[%c0, %c0_1] : memref<256x4xf32, #tpu.memory_space<vmem>>, vector<256x4xf32>
    %c0_2 = arith.constant 0 : index
    %c0_3 = arith.constant 0 : index
    %4 = vector.load %arg3[%c0_2, %c0_3] : memref<256x72xbf16, #tpu.memory_space<vmem>>, vector<256x72xbf16>
    %c0_4 = arith.constant 0 : index
    %c0_5 = arith.constant 0 : index
    %5 = vector.load %arg4[%c0_4, %c0_5] : memref<72x4xbf16, #tpu.memory_space<vmem>>, vector<72x4xbf16>
    %cst = arith.constant dense<0.000000e+00> : vector<256x4xf32>
    %6 = tpu.matmul %4, %5, %cst {dimension_numbers = #tpu.dot_dimension_numbers<[1], [0], [0], [1], [0, 0, 1, 1], [], []>} : vector<256x72xbf16>, vector<72x4xbf16>, vector<256x4xf32> -> vector<256x4xf32>
    %7 = arith.addf %3, %6 : vector<256x4xf32>
    %c0_6 = arith.constant 0 : index
    %c0_7 = arith.constant 0 : index
    %8 = vector.load %arg8[%c0_6, %c0_7] : memref<256x4xf32, #tpu.memory_space<vmem>>, vector<256x4xf32>
    tpu.vector_store %arg8[%c0_6, %c0_7], %7 {strides = array<i32>} : memref<256x4xf32, #tpu.memory_space<vmem>>, vector<256x4xf32>,
    %c0_i32_8 = arith.constant 0 : i32
    %9 = arith.cmpi eq, %arg2, %c0_i32_8 : i32
    %10 = arith.extui %9 : i1 to i32
    %c0_i32_9 = arith.constant 0 : i32
    %11 = arith.cmpi ne, %10, %c0_i32_9 : i32
    scf.if %11 {
      %c0_10 = arith.constant 0 : index
      %c0_11 = arith.constant 0 : index
      %12 = vector.load %arg8[%c0_10, %c0_11] : memref<256x4xf32, #tpu.memory_space<vmem>>, vector<256x4xf32>
      %c0_12 = arith.constant 0 : index
      %c0_13 = arith.constant 0 : index
      %13 = vector.load %arg5[%c0_12, %c0_13] : memref<1x4xf32, #tpu.memory_space<vmem>>, vector<1x4xf32>
      %14 = vector.broadcast %13 : vector<1x4xf32> to vector<256x4xf32>
      %15 = arith.mulf %12, %14 : vector<256x4xf32>
      %c0_14 = arith.constant 0 : index
      %c0_15 = arith.constant 0 : index
      %16 = vector.load %arg6[%c0_14, %c0_15] : memref<1x4xf32, #tpu.memory_space<vmem>>, vector<1x4xf32>
      %17 = vector.broadcast %16 : vector<1x4xf32> to vector<256x4xf32>
      %18 = arith.addf %15, %17 : vector<256x4xf32>
      %cst_16 = arith.constant 0.000000e+00 : f32
      %19 = vector.broadcast %cst_16 : f32 to vector<256x4xf32>
      %20 = arith.maximumf %18, %19 : vector<256x4xf32>
      %c0_17 = arith.constant 0 : index
      %c0_18 = arith.constant 0 : index
      %21 = vector.load %arg7[%c0_17, %c0_18] : memref<256x4xf32, #tpu.memory_space<vmem>>, vector<256x4xf32>
      tpu.vector_store %arg7[%c0_17, %c0_18], %20 {strides = array<i32>} : memref<256x4xf32, #tpu.memory_space<vmem>>, vector<256x4xf32>,
    } else {
    }
    return
  }
  func.func @transform_0(%arg0: i32, %arg1: i32, %arg2: i32) -> (i32, i32) {
    %c0_i32 = arith.constant 0 : i32
    return %arg0, %arg2 : i32, i32
  }
  func.func @transform_1(%arg0: i32, %arg1: i32, %arg2: i32) -> (i32, i32) {
    %c0_i32 = arith.constant 0 : i32
    return %arg2, %arg1 : i32, i32
  }
  func.func @transform_2(%arg0: i32, %arg1: i32, %arg2: i32) -> (i32, i32) {
    %c0_i32 = arith.constant 0 : i32
    %c0_i32_0 = arith.constant 0 : i32
    return %c0_i32, %arg1 : i32, i32
  }
  func.func @transform_3(%arg0: i32, %arg1: i32, %arg2: i32) -> (i32, i32) {
    %c0_i32 = arith.constant 0 : i32
    %c0_i32_0 = arith.constant 0 : i32
    return %c0_i32, %arg1 : i32, i32
  }
  func.func @transform_4(%arg0: i32, %arg1: i32, %arg2: i32) -> (i32, i32) {
    %c0_i32 = arith.constant 0 : i32
    return %arg0, %arg1 : i32, i32
  }
}

</mosaic_0001>

<llo_original>
// kernel: two_conv_block_forward.2
$region0: #{two_conv_block_forward.2}
  #allocation0 [shape = 'u32[]', space=smem, size = 0x4, offset = 0x4, fixed_abs, tag = 'smem constant byte address 0x4 - core index']
  #allocation1 [shape = 'u32[144,128]{1,0:T(1,128)}', space=vmem, size = 0x12000, scoped, tag = 'internal scratch']
  #allocation2 [shape = 'f32[256,8]{1,0:T(8,128)}', space=vmem, size = 0x20000, scoped, tag = 'scratch operand']
  %s0 = inlined_call_operand.vmem [shape: bf16[512,36], index: 0, kind: input, shape index: {}]
  %s1 = inlined_call_operand.vmem [shape: bf16[36,8], index: 1, kind: input, shape index: {}]
  %s2 = inlined_call_operand.vmem [shape: f32[1,8], index: 2, kind: input, shape index: {}]
  %s3 = inlined_call_operand.vmem [shape: f32[1,8], index: 3, kind: input, shape index: {}]
  %s4 = inlined_call_operand.vmem [shape: bf16[512,8], index: 4, kind: output, shape index: {}]
  %s5 = sld [smem:[#allocation0]]
  $region57: #{two_conv_block_forward.2} parent=0
    _
  %s7 = ssub.s32 1, %s5
  %s8 = scalar_select 0, %s7, %s5
  loop: start=0, step=1, limit=4
  $region2: #{two_conv_block_forward.2} parent=0 // loop_pre_header
    _
  $region3: #{two_conv_block_forward.2} parent=0 // loop_header
    %s10 = sphi 0, %s14
    %p11 = scmp.ge.s32.totalorder %s10, 4
    %s17 = sphi 0, %s36
    %s18 = sphi 0, %s32
    %s19 = sphi 0, %s28
    %s20 = sphi 0, %s17
    %s21 = sphi 0, %s18
    %s22 = sphi 0, %s19
    %s23 = sphi 0, %s20
    %s24 = sphi 0, %s21
    %s25 = sphi 0, %s22
    %s41 = sphi 0, %s43
    %s44 = sphi 0, %s41
    %s45 = sphi 0, %s44
    %s61 = sphi 0, %s45
    %s69 = sphi 0, %s71
    %s72 = sphi 0, %s69
    %s73 = sphi 0, %s72
    %s89 = sphi 0, %s73
    %s95 = sphi 0, %s97
    %s98 = sphi 0, %s95
    %s99 = sphi 0, %s98
    %s115 = sphi 0, %s99
    %s121 = sphi 0, %s123
    %s124 = sphi 0, %s121
    %s125 = sphi 0, %s124
    %s141 = sphi 0, %s125
    %s149 = sphi 0, %s151
    %s152 = sphi 0, %s149
    %s153 = sphi 0, %s152
    %s169 = sphi 0, %s153
  $region4: #{two_conv_block_forward.2} parent=0 // loop_header_branch
    %13 = sbr.rel (%p11) target = $region8
  $region5: #{two_conv_block_forward.2} parent=0 // loop_body
    %s15 = ssub.s32 %s10, 1
    %s16 = ssub.s32 %s10, 2
    %s26 = sadd.s32 1, %s19
    %p27 = scmp.ge.s32.totalorder %s26, 1
    %s28 = scalar_select %p27, 0, %s26
    %s29 = sadd.s32 1, %s18
    %s30 = scalar_select %p27, %s29, %s18
    %p31 = scmp.ge.s32.totalorder %s30, 1
    %s32 = scalar_select %p31, 0, %s30
    %s33 = sadd.s32 1, %s17
    %s34 = scalar_select %p31, %s33, %s17
    %p35 = scmp.ge.s32.totalorder %s34, 2
    %s36 = scalar_select %p35, 0, %s34
    %s37 = ssub.s32 %s17, %s36
    %s38 = ssub.s32 %s19, %s28
    %s39 = sor.u32 %s37, %s38
    %p40 = scmp.eq.s32.totalorder %s39, 0
    %s42 = sadd.s32 %s41, 1
    %s43 = scalar_select %p40, %s41, %s42
    %p46 = pneg %p40
    %p47 = scmp.eq.s32.totalorder %s10, 1
    %p48 = por %p46, %p47
    %p49 = scmp.ne.s32.totalorder %s41, %s44
    %p50 = scmp.eq.s32.totalorder %s10, 0
    %p51 = por %p49, %p50
    %p52 = scmp.ne.s32.totalorder %s41, %s44
    %p53 = scmp.eq.s32.totalorder %s15, 1
    %p54 = por %p52, %p53
    %p55 = scmp.ne.s32.totalorder %s44, %s45
    %p56 = scmp.eq.s32.totalorder %s15, 0
    %p57 = por %p55, %p56
    %p58 = scmp.ne.s32.totalorder %s44, %s45
    %p59 = scmp.eq.s32.totalorder %s16, 1
    %p60 = por %p58, %p59
    %p62 = scmp.ne.s32.totalorder %s45, %s61
    %p63 = scmp.eq.s32.totalorder %s16, 0
    %p64 = por %p62, %p63
    %s65 = ssub.s32 %s19, %s28
    %s66 = ssub.s32 %s18, %s32
    %s67 = sor.u32 %s65, %s66
    %p68 = scmp.eq.s32.totalorder %s67, 0
    %s70 = sadd.s32 %s69, 1
    %s71 = scalar_select %p68, %s69, %s70
    %p74 = pneg %p68
    %p75 = scmp.eq.s32.totalorder %s10, 1
    %p76 = por %p74, %p75
    %p77 = scmp.ne.s32.totalorder %s69, %s72
    %p78 = scmp.eq.s32.totalorder %s10, 0
    %p79 = por %p77, %p78
    %p80 = scmp.ne.s32.totalorder %s69, %s72
    %p81 = scmp.eq.s32.totalorder %s15, 1
    %p82 = por %p80, %p81
    %p83 = scmp.ne.s32.totalorder %s72, %s73
    %p84 = scmp.eq.s32.totalorder %s15, 0
    %p85 = por %p83, %p84
    %p86 = scmp.ne.s32.totalorder %s72, %s73
    %p87 = scmp.eq.s32.totalorder %s16, 1
    %p88 = por %p86, %p87
    %p90 = scmp.ne.s32.totalorder %s73, %s89
    %p91 = scmp.eq.s32.totalorder %s16, 0
    %p92 = por %p90, %p91
    %s93 = ssub.s32 %s18, %s32
    %p94 = scmp.eq.s32.totalorder %s93, 0
    %s96 = sadd.s32 %s95, 1
    %s97 = scalar_select %p94, %s95, %s96
    %p100 = pneg %p94
    %p101 = scmp.eq.s32.totalorder %s10, 1
    %p102 = por %p100, %p101
    %p103 = scmp.ne.s32.totalorder %s95, %s98
    %p104 = scmp.eq.s32.totalorder %s10, 0
    %p105 = por %p103, %p104
    %p106 = scmp.ne.s32.totalorder %s95, %s98
    %p107 = scmp.eq.s32.totalorder %s15, 1
    %p108 = por %p106, %p107
    %p109 = scmp.ne.s32.totalorder %s98, %s99
    %p110 = scmp.eq.s32.totalorder %s15, 0
    %p111 = por %p109, %p110
    %p112 = scmp.ne.s32.totalorder %s98, %s99
    %p113 = scmp.eq.s32.totalorder %s16, 1
    %p114 = por %p112, %p113
    %p116 = scmp.ne.s32.totalorder %s99, %s115
    %p117 = scmp.eq.s32.totalorder %s16, 0
    %p118 = por %p116, %p117
    %s119 = ssub.s32 %s18, %s32
    %p120 = scmp.eq.s32.totalorder %s119, 0
    %s122 = sadd.s32 %s121, 1
    %s123 = scalar_select %p120, %s121, %s122
    %p126 = pneg %p120
    %p127 = scmp.eq.s32.totalorder %s10, 1
    %p128 = por %p126, %p127
    %p129 = scmp.ne.s32.totalorder %s121, %s124
    %p130 = scmp.eq.s32.totalorder %s10, 0
    %p131 = por %p129, %p130
    %p132 = scmp.ne.s32.totalorder %s121, %s124
    %p133 = scmp.eq.s32.totalorder %s15, 1
    %p134 = por %p132, %p133
    %p135 = scmp.ne.s32.totalorder %s124, %s125
    %p136 = scmp.eq.s32.totalorder %s15, 0
    %p137 = por %p135, %p136
    %p138 = scmp.ne.s32.totalorder %s124, %s125
    %p139 = scmp.eq.s32.totalorder %s16, 1
    %p140 = por %p138, %p139
    %p142 = scmp.ne.s32.totalorder %s125, %s141
    %p143 = scmp.eq.s32.totalorder %s16, 0
    %p144 = por %p142, %p143
    %s145 = ssub.s32 %s17, %s36
    %s146 = ssub.s32 %s18, %s32
    %s147 = sor.u32 %s145, %s146
    %p148 = scmp.eq.s32.totalorder %s147, 0
    %s150 = sadd.s32 %s149, 1
    %s151 = scalar_select %p148, %s149, %s150
    %p154 = pneg %p148
    %p155 = scmp.eq.s32.totalorder %s10, 1
    %p156 = por %p154, %p155
    %p157 = scmp.ne.s32.totalorder %s149, %s152
    %p158 = scmp.eq.s32.totalorder %s10, 0
    %p159 = por %p157, %p158
    %p160 = scmp.ne.s32.totalorder %s149, %s152
    %p161 = scmp.eq.s32.totalorder %s15, 1
    %p162 = por %p160, %p161
    %p163 = scmp.ne.s32.totalorder %s152, %s153
    %p164 = scmp.eq.s32.totalorder %s15, 0
    %p165 = por %p163, %p164
    %p166 = scmp.ne.s32.totalorder %s152, %s153
    %p167 = scmp.eq.s32.totalorder %s16, 1
    %p168 = por %p166, %p167
    %p170 = scmp.ne.s32.totalorder %s153, %s169
    %p171 = scmp.eq.s32.totalorder %s16, 0
    %p172 = por %p170, %p171
    %p173 = scmp.le.s32.totalorder 1, %s10
    %p174 = scmp.lt.s32.totalorder %s10, 3
    %p175 = pnand %p173, %p174
    %p176 = pneg %p175
    // Predicated region
    $region9: #{two_conv_block_forward.2} parent=5 // pred_check
      _
    $region10: #{two_conv_block_forward.2} parent=5 // pred_check_branch
      %178 = sbr.rel (%p175) target = $region12
    $region11: #{two_conv_block_forward.2} parent=5 // pred_region
      %s179 = ssub.s32 %s10, 1
      // Predicated region
      $region13: #{two_conv_block_forward.2} parent=11 // pred_check
        %p180 = pneg %p85
      $region14: #{two_conv_block_forward.2} parent=11 // pred_check_branch
        %182 = sbr.rel (%p180) target = $region16
      $region15: #{two_conv_block_forward.2} parent=11 // pred_region
        %s183 = smul.u32 5, %s22
        %p184 = scmp.lt.s32.totalorder %s183, 4
        %s185 = scalar_select %p184, %s183, 4
        %p186 = scmp.lt.s32.totalorder %s21, 0
        %s187 = scalar_select %p186, %s21, 0
        %s188 = sadd.s32 %s187, %s185
        %s189 = smul.addr %s188, 4
        %s190 = scalar_lea.vmem %s1, %s189
        %s191 = smul.u32 5, %s22
      $region16: #{two_conv_block_forward.2} parent=11 // pred_fallthru
        _
      // Predicated region
      $region17: #{two_conv_block_forward.2} parent=11 // pred_check
        %p192 = pneg %p111
      $region18: #{two_conv_block_forward.2} parent=11 // pred_check_branch
        %194 = sbr.rel (%p192) target = $region20
      $region19: #{two_conv_block_forward.2} parent=11 // pred_region
        %p195 = scmp.lt.s32.totalorder %s21, 0
        %s196 = scalar_select %p195, %s21, 0
        %s197 = scalar_lea.vmem %s2, %s196
      $region20: #{two_conv_block_forward.2} parent=11 // pred_fallthru
        _
      // Predicated region
      $region21: #{two_conv_block_forward.2} parent=11 // pred_check
        %p198 = pneg %p137
      $region22: #{two_conv_block_forward.2} parent=11 // pred_check_branch
        %200 = sbr.rel (%p198) target = $region24
      $region23: #{two_conv_block_forward.2} parent=11 // pred_region
        %p201 = scmp.lt.s32.totalorder %s21, 0
        %s202 = scalar_select %p201, %s21, 0
        %s203 = scalar_lea.vmem %s3, %s202
      $region24: #{two_conv_block_forward.2} parent=11 // pred_fallthru
        _
    $region12: #{two_conv_block_forward.2} parent=5 // pred_fallthru
      _
    %p204 = scmp.lt.s32.totalorder %s10, 2
    // Predicated region
    $region25: #{two_conv_block_forward.2} parent=5 // pred_check
      %p205 = pneg %p204
    $region26: #{two_conv_block_forward.2} parent=5 // pred_check_branch
      %207 = sbr.rel (%p205) target = $region28
    $region27: #{two_conv_block_forward.2} parent=5 // pred_region
      // Predicated region
      $region29: #{two_conv_block_forward.2} parent=27 // pred_check
        %p208 = pneg %p51
      $region30: #{two_conv_block_forward.2} parent=27 // pred_check_branch
        %210 = sbr.rel (%p208) target = $region32
      $region31: #{two_conv_block_forward.2} parent=27 // pred_region
        %s211 = smul.u32 32, %s17
        %p212 = scmp.lt.s32.totalorder %s211, 63
        %s213 = scalar_select %p212, %s211, 63
        %p214 = scmp.lt.s32.totalorder %s19, 0
        %s215 = scalar_select %p214, %s19, 0
        %s216 = sadd.s32 %s215, %s213
        %s217 = smul.addr %s216, 4
        %s218 = scalar_lea.vmem %s0, %s217
        %s219 = smul.u32 32, %s17
      $region32: #{two_conv_block_forward.2} parent=27 // pred_fallthru
        _
    $region28: #{two_conv_block_forward.2} parent=5 // pred_fallthru
      _
    %p220 = scmp.le.s32.totalorder 1, %s10
    %p221 = scmp.lt.s32.totalorder %s10, 3
    %p222 = pnand %p220, %p221
    %p223 = pneg %p222
    // Predicated region
    $region33: #{two_conv_block_forward.2} parent=5 // pred_check
      _
    $region34: #{two_conv_block_forward.2} parent=5 // pred_check_branch
      %225 = sbr.rel (%p222) target = $region36
    $region35: #{two_conv_block_forward.2} parent=5 // pred_region
      %s226 = ssub.s32 %s10, 1
      %s227 = smul.u32 32, %s20
      %p228 = scmp.lt.s32.totalorder %s227, 63
      %s229 = scalar_select %p228, %s227, 63
      %p230 = scmp.lt.s32.totalorder %s22, 0
      %s231 = scalar_select %p230, %s22, 0
      %s232 = sadd.s32 %s231, %s229
      %s233 = smul.addr %s232, 4
      %s234 = scalar_lea.vmem %s0, %s233
      %p235 = pneg %p57
      %p236 = pneg %p54
      %s237 = smul.u32 5, %s22
      %p238 = scmp.lt.s32.totalorder %s237, 4
      %s239 = scalar_select %p238, %s237, 4
      %p240 = scmp.lt.s32.totalorder %s21, 0
      %s241 = scalar_select %p240, %s21, 0
      %s242 = sadd.s32 %s241, %s239
      %s243 = smul.addr %s242, 4
      %s244 = scalar_lea.vmem %s1, %s243
      %p245 = pneg %p85
      %p246 = pneg %p82
      %p247 = scmp.lt.s32.totalorder %s21, 0
      %s248 = scalar_select %p247, %s21, 0
      %s249 = scalar_lea.vmem %s2, %s248
      %p250 = pneg %p111
      %p251 = pneg %p108
      %p252 = scmp.lt.s32.totalorder %s21, 0
      %s253 = scalar_select %p252, %s21, 0
      %s254 = scalar_lea.vmem %s3, %s253
      %p255 = pneg %p137
      %p256 = pneg %p134
      %p257 = pneg %p165
      %p258 = pneg %p162
      %s259 = smul.u32 32, %s20
      %p260 = scmp.lt.s32.totalorder %s259, 63
      %s261 = scalar_select %p260, %s259, 63
      %p262 = scmp.lt.s32.totalorder %s21, 0
      %s263 = scalar_select %p262, %s21, 0
      %s264 = sadd.s32 %s263, %s261
      %s265 = smul.addr %s264, 4
      %s266 = scalar_lea.vmem %s4, %s265
      %s267 = smul.u32 32, %s20
      %p268 = scmp.lt.s32.totalorder %s267, 63
      %s269 = scalar_select %p268, %s267, 63
      %p270 = scmp.lt.s32.totalorder %s22, 0
      %s271 = scalar_select %p270, %s22, 0
      %s272 = sadd.s32 %s271, %s269
      %s273 = smul.addr %s272, 4
      %s274 = scalar_lea.vmem %s0, %s273
      %s275 = smul.u32 32, %s20
      %s276 = smul.u32 5, %s22
      %p277 = scmp.lt.s32.totalorder %s276, 4
      %s278 = scalar_select %p277, %s276, 4
      %p279 = scmp.lt.s32.totalorder %s21, 0
      %s280 = scalar_select %p279, %s21, 0
      %s281 = sadd.s32 %s280, %s278
      %s282 = smul.addr %s281, 4
      %s283 = scalar_lea.vmem %s1, %s282
      %s284 = smul.u32 5, %s22
      %p285 = scmp.lt.s32.totalorder %s21, 0
      %s286 = scalar_select %p285, %s21, 0
      %s287 = scalar_lea.vmem %s2, %s286
      %p288 = scmp.lt.s32.totalorder %s21, 0
      %s289 = scalar_select %p288, %s21, 0
      %s290 = scalar_lea.vmem %s3, %s289
      %s291 = smul.u32 32, %s20
      %p292 = scmp.lt.s32.totalorder %s291, 63
      %s293 = scalar_select %p292, %s291, 63
      %p294 = scmp.lt.s32.totalorder %s21, 0
      %s295 = scalar_select %p294, %s21, 0
      %s296 = sadd.s32 %s295, %s293
      %s297 = smul.addr %s296, 4
      %s298 = scalar_lea.vmem %s4, %s297
      %s299 = smul.u32 32, %s20
      %p301 = scmp.eq.s32.totalorder %s22, 0
      // Predicated region
      $region37: #{two_conv_block_forward.2} parent=35 // pred_check
        %p302 = pneg %p301
      $region38: #{two_conv_block_forward.2} parent=35 // pred_check_branch
        %304 = sbr.rel (%p302) target = $region40
      $region39: #{two_conv_block_forward.2} parent=35 // pred_region
        %vm305 = vcmask 64512
        %306 = vst.msk [vmem:[#allocation2] sm:$0xff] %vm305, 0.0
        %307 = vst.msk [vmem:[#allocation2 + $0x8] sm:$0xff] %vm305, 0.0
        %308 = vst.msk [vmem:[#allocation2 + $0x10] sm:$0xff] %vm305, 0.0
        %309 = vst.msk [vmem:[#allocation2 + $0x18] sm:$0xff] %vm305, 0.0
        %310 = vst.msk [vmem:[#allocation2 + $0x20] sm:$0xff] %vm305, 0.0
        %311 = vst.msk [vmem:[#allocation2 + $0x28] sm:$0xff] %vm305, 0.0
        %312 = vst.msk [vmem:[#allocation2 + $0x30] sm:$0xff] %vm305, 0.0
        %313 = vst.msk [vmem:[#allocation2 + $0x38] sm:$0xff] %vm305, 0.0
        %314 = vst.msk [vmem:[#allocation2 + $0x40] sm:$0xff] %vm305, 0.0
        %315 = vst.msk [vmem:[#allocation2 + $0x48] sm:$0xff] %vm305, 0.0
        %316 = vst.msk [vmem:[#allocation2 + $0x50] sm:$0xff] %vm305, 0.0
        %317 = vst.msk [vmem:[#allocation2 + $0x58] sm:$0xff] %vm305, 0.0
        %318 = vst.msk [vmem:[#allocation2 + $0x60] sm:$0xff] %vm305, 0.0
        %319 = vst.msk [vmem:[#allocation2 + $0x68] sm:$0xff] %vm305, 0.0
        %320 = vst.msk [vmem:[#allocation2 + $0x70] sm:$0xff] %vm305, 0.0
        %321 = vst.msk [vmem:[#allocation2 + $0x78] sm:$0xff] %vm305, 0.0
        %322 = vst.msk [vmem:[#allocation2 + $0x80] sm:$0xff] %vm305, 0.0
        %323 = vst.msk [vmem:[#allocation2 + $0x88] sm:$0xff] %vm305, 0.0
        %324 = vst.msk [vmem:[#allocation2 + $0x90] sm:$0xff] %vm305, 0.0
        %325 = vst.msk [vmem:[#allocation2 + $0x98] sm:$0xff] %vm305, 0.0
        %326 = vst.msk [vmem:[#allocation2 + $0xa0] sm:$0xff] %vm305, 0.0
        %327 = vst.msk [vmem:[#allocation2 + $0xa8] sm:$0xff] %vm305, 0.0
        %328 = vst.msk [vmem:[#allocation2 + $0xb0] sm:$0xff] %vm305, 0.0
        %329 = vst.msk [vmem:[#allocation2 + $0xb8] sm:$0xff] %vm305, 0.0
        %330 = vst.msk [vmem:[#allocation2 + $0xc0] sm:$0xff] %vm305, 0.0
        %331 = vst.msk [vmem:[#allocation2 + $0xc8] sm:$0xff] %vm305, 0.0
        %332 = vst.msk [vmem:[#allocation2 + $0xd0] sm:$0xff] %vm305, 0.0
        %333 = vst.msk [vmem:[#allocation2 + $0xd8] sm:$0xff] %vm305, 0.0
        %334 = vst.msk [vmem:[#allocation2 + $0xe0] sm:$0xff] %vm305, 0.0
        %335 = vst.msk [vmem:[#allocation2 + $0xe8] sm:$0xff] %vm305, 0.0
        %336 = vst.msk [vmem:[#allocation2 + $0xf0] sm:$0xff] %vm305, 0.0
        %337 = vst.msk [vmem:[#allocation2 + $0xf8] sm:$0xff] %vm305, 0.0
      $region40: #{two_conv_block_forward.2} parent=35 // pred_fallthru
        _
      %v338 = vld [vmem:[#allocation2] sm:$0xff]
      %v339 = vld [vmem:[#allocation2 + $0x8] sm:$0xff]
      %v340 = vld [vmem:[#allocation2 + $0x10] sm:$0xff]
      %v341 = vld [vmem:[#allocation2 + $0x18] sm:$0xff]
      %v342 = vld [vmem:[#allocation2 + $0x20] sm:$0xff]
      %v343 = vld [vmem:[#allocation2 + $0x28] sm:$0xff]
      %v344 = vld [vmem:[#allocation2 + $0x30] sm:$0xff]
      %v345 = vld [vmem:[#allocation2 + $0x38] sm:$0xff]
      %v346 = vld [vmem:[#allocation2 + $0x40] sm:$0xff]
      %v347 = vld [vmem:[#allocation2 + $0x48] sm:$0xff]
      %v348 = vld [vmem:[#allocation2 + $0x50] sm:$0xff]
      %v349 = vld [vmem:[#allocation2 + $0x58] sm:$0xff]
      %v350 = vld [vmem:[#allocation2 + $0x60] sm:$0xff]
      %v351 = vld [vmem:[#allocation2 + $0x68] sm:$0xff]
      %v352 = vld [vmem:[#allocation2 + $0x70] sm:$0xff]
      %v353 = vld [vmem:[#allocation2 + $0x78] sm:$0xff]
      %v354 = vld [vmem:[#allocation2 + $0x80] sm:$0xff]
      %v355 = vld [vmem:[#allocation2 + $0x88] sm:$0xff]
      %v356 = vld [vmem:[#allocation2 + $0x90] sm:$0xff]
      %v357 = vld [vmem:[#allocation2 + $0x98] sm:$0xff]
      %v358 = vld [vmem:[#allocation2 + $0xa0] sm:$0xff]
      %v359 = vld [vmem:[#allocation2 + $0xa8] sm:$0xff]
      %v360 = vld [vmem:[#allocation2 + $0xb0] sm:$0xff]
      %v361 = vld [vmem:[#allocation2 + $0xb8] sm:$0xff]
      %v362 = vld [vmem:[#allocation2 + $0xc0] sm:$0xff]
      %v363 = vld [vmem:[#allocation2 + $0xc8] sm:$0xff]
      %v364 = vld [vmem:[#allocation2 + $0xd0] sm:$0xff]
      %v365 = vld [vmem:[#allocation2 + $0xd8] sm:$0xff]
      %v366 = vld [vmem:[#allocation2 + $0xe0] sm:$0xff]
      %v367 = vld [vmem:[#allocation2 + $0xe8] sm:$0xff]
      %v368 = vld [vmem:[#allocation2 + $0xf0] sm:$0xff]
      %v369 = vld [vmem:[#allocation2 + $0xf8] sm:$0xff]
      %v370 = vld [vmem:[%s274] sm:$0xf]
      %v371 = vld [vmem:[%s274 + $0x4] sm:$0xf]
      %v372 = vld [vmem:[%s274 + $0x8] sm:$0xf]
      %v373 = vld [vmem:[%s274 + $0xc] sm:$0xf]
      %v374 = vld [vmem:[%s274 + $0x10] sm:$0xf]
      %v375 = vld [vmem:[%s274 + $0x14] sm:$0xf]
      %v376 = vld [vmem:[%s274 + $0x18] sm:$0xf]
      %v377 = vld [vmem:[%s274 + $0x1c] sm:$0xf]
      %v378 = vld [vmem:[%s274 + $0x20] sm:$0xf]
      %v379 = vld [vmem:[%s274 + $0x24] sm:$0xf]
      %v380 = vld [vmem:[%s274 + $0x28] sm:$0xf]
      %v381 = vld [vmem:[%s274 + $0x2c] sm:$0xf]
      %v382 = vld [vmem:[%s274 + $0x30] sm:$0xf]
      %v383 = vld [vmem:[%s274 + $0x34] sm:$0xf]
      %v384 = vld [vmem:[%s274 + $0x38] sm:$0xf]
      %v385 = vld [vmem:[%s274 + $0x3c] sm:$0xf]
      %v386 = vld [vmem:[%s274 + $0x40] sm:$0xf]
      %v387 = vld [vmem:[%s274 + $0x44] sm:$0xf]
      %v388 = vld [vmem:[%s274 + $0x48] sm:$0xf]
      %v389 = vld [vmem:[%s274 + $0x4c] sm:$0xf]
      %v390 = vld [vmem:[%s274 + $0x50] sm:$0xf]
      %v391 = vld [vmem:[%s274 + $0x54] sm:$0xf]
      %v392 = vld [vmem:[%s274 + $0x58] sm:$0xf]
      %v393 = vld [vmem:[%s274 + $0x5c] sm:$0xf]
      %v394 = vld [vmem:[%s274 + $0x60] sm:$0xf]
      %v395 = vld [vmem:[%s274 + $0x64] sm:$0xf]
      %v396 = vld [vmem:[%s274 + $0x68] sm:$0xf]
      %v397 = vld [vmem:[%s274 + $0x6c] sm:$0xf]
      %v398 = vld [vmem:[%s274 + $0x70] sm:$0xf]
      %v399 = vld [vmem:[%s274 + $0x74] sm:$0xf]
      %v400 = vld [vmem:[%s274 + $0x78] sm:$0xf]
      %v401 = vld [vmem:[%s274 + $0x7c] sm:$0xf]
      %v402 = vld [vmem:[%s283] sm:$0xf]
      %v403 = vld [vmem:[%s283 + $0x4] sm:$0xf]
      %v404 = vld [vmem:[%s283 + $0x8] sm:$0xf]
      %v405 = vld [vmem:[%s283 + $0xc] sm:$0xf]
      %v406 = vld [vmem:[%s283 + $0x10] sm:$0x3]
      %v439 = vunpack.c.l.b16 %v370
      %v440 = vunpack.c.l.b16 %v371
      %v441 = vunpack.c.l.b16 %v372
      %v442 = vunpack.c.l.b16 %v373
      %v443 = vunpack.c.l.b16 %v374
      %v444 = vunpack.c.l.b16 %v375
      %v445 = vunpack.c.l.b16 %v376
      %v446 = vunpack.c.l.b16 %v377
      %v447 = vunpack.c.l.b16 %v378
      %v448 = vunpack.c.l.b16 %v379
      %v449 = vunpack.c.l.b16 %v380
      %v450 = vunpack.c.l.b16 %v381
      %v451 = vunpack.c.l.b16 %v382
      %v452 = vunpack.c.l.b16 %v383
      %v453 = vunpack.c.l.b16 %v384
      %v454 = vunpack.c.l.b16 %v385
      %v455 = vunpack.c.l.b16 %v386
      %v456 = vunpack.c.l.b16 %v387
      %v457 = vunpack.c.l.b16 %v388
      %v458 = vunpack.c.l.b16 %v389
      %v459 = vunpack.c.l.b16 %v390
      %v460 = vunpack.c.l.b16 %v391
      %v461 = vunpack.c.l.b16 %v392
      %v462 = vunpack.c.l.b16 %v393
      %v463 = vunpack.c.l.b16 %v394
      %v464 = vunpack.c.l.b16 %v395
      %v465 = vunpack.c.l.b16 %v396
      %v466 = vunpack.c.l.b16 %v397
      %v467 = vunpack.c.l.b16 %v398
      %v468 = vunpack.c.l.b16 %v399
      %v469 = vunpack.c.l.b16 %v400
      %v470 = vunpack.c.l.b16 %v401
      %v471 = vpack.c.b16 %v440, %v439
      %v472 = vpack.c.b16 %v442, %v441
      %v473 = vpack.c.b16 %v444, %v443
      %v474 = vpack.c.b16 %v446, %v445
      %v475 = vpack.c.b16 %v448, %v447
      %v476 = vpack.c.b16 %v450, %v449
      %v477 = vpack.c.b16 %v452, %v451
      %v478 = vpack.c.b16 %v454, %v453
      %v479 = vpack.c.b16 %v456, %v455
      %v480 = vpack.c.b16 %v458, %v457
      %v481 = vpack.c.b16 %v460, %v459
      %v482 = vpack.c.b16 %v462, %v461
      %v483 = vpack.c.b16 %v464, %v463
      %v484 = vpack.c.b16 %v466, %v465
      %v485 = vpack.c.b16 %v468, %v467
      %v486 = vpack.c.b16 %v470, %v469
      %v492 = vunpack.c.l.b16 %v402
      %v493 = vunpack.c.l.b16 %v403
      %v494 = vunpack.c.l.b16 %v404
      %v495 = vunpack.c.l.b16 %v405
      %v496 = vunpack.c.l.b16 %v406
      %v497 = vpack.c.b16 %v493, %v492
      %v498 = vpack.c.b16 %v495, %v494
      %v499 = vpack.c.b16 %v496, %v496
      %vm502 = vcmask 293888
      %v504 = vsel %vm502, %v471, 0
      %v507 = vsel %vm502, %v472, 0
      %v510 = vsel %vm502, %v473, 0
      %v513 = vsel %vm502, %v474, 0
      %v516 = vsel %vm502, %v475, 0
      %v519 = vsel %vm502, %v476, 0
      %v522 = vsel %vm502, %v477, 0
      %v525 = vsel %vm502, %v478, 0
      %v528 = vsel %vm502, %v479, 0
      %v531 = vsel %vm502, %v480, 0
      %v534 = vsel %vm502, %v481, 0
      %v537 = vsel %vm502, %v482, 0
      %v540 = vsel %vm502, %v483, 0
      %v543 = vsel %vm502, %v484, 0
      %v546 = vsel %vm502, %v485, 0
      %v549 = vsel %vm502, %v486, 0
      %vm551 = vcmask 1041408
      %v553 = vsel %vm551, %v499, 0
      %555 = vmatprep.subr.bf16.mxu0 0
      %556 = vmatpush1.bf16.msra.mxu0 %v497
      %557 = vmatprep.subr.bf16.mxu0 0
      %558 = vmatpush1.bf16.msra.mxu0 %v498
      %559 = vmatprep.subr.bf16.mxu0 0
      %560 = vmatpush1.bf16.msra.mxu0 %v553
      %561 = vmatprep.subr.bf16.mxu0 0
      %562 = vmatpush1.bf16.msra.mxu0 0
      %563 = vmatprep.subr.bf16.mxu0 0
      %564 = vmatpush1.bf16.msra.mxu0 0
      %565 = vmatprep.subr.bf16.mxu0 0
      %566 = vmatpush1.bf16.msra.mxu0 0
      %567 = vmatprep.subr.bf16.mxu0 0
      %568 = vmatpush1.bf16.msra.mxu0 0
      %569 = vmatprep.subr.bf16.mxu0 0
      %570 = vmatpush1.bf16.msra.mxu0 0
      %571 = vmatprep.subr.bf16.mxu0 0
      %572 = vmatpush1.bf16.msra.mxu0 0
      %573 = vmatprep.subr.bf16.mxu0 0
      %574 = vmatpush1.bf16.msra.mxu0 0
      %575 = vmatprep.subr.bf16.mxu0 0
      %576 = vmatpush1.bf16.msra.mxu0 0
      %577 = vmatprep.subr.bf16.mxu0 0
      %578 = vmatpush1.bf16.msra.mxu0 0
      %579 = vmatprep.subr.bf16.mxu0 0
      %580 = vmatpush1.bf16.msra.mxu0 0
      %581 = vmatprep.subr.bf16.mxu0 0
      %582 = vmatpush1.bf16.msra.mxu0 0
      %583 = vmatprep.subr.bf16.mxu0 0
      %584 = vmatpush1.bf16.msra.mxu0 0
      %585 = vmatprep.subr.bf16.mxu0 0
      %586 = vmatpush1.bf16.msra.mxu0 0
      %587 = vmatprep.mubr.bf16.mxu0 0
      %588 = vmatmul.mubr.bf16.gmra.mrb[0].mxu0 %v504
      %v589 = vpop.f32.mrb[0].mxu0
      %v590 = vadd.f32 0.0, %v589
      %v591 = vpop.f32.mrb[0].mxu0
      %v592 = vpop.f32.mrb[0].mxu0
      %v593 = vadd.f32 0.0, %v592
      %v594 = vpop.f32.mrb[0].mxu0
      %595 = vmatprep.mubr.bf16.mxu0 0
      %596 = vmatmul.mubr.bf16.gmra.mrb[0].mxu0 %v507
      %v597 = vpop.f32.mrb[0].mxu0
      %v598 = vadd.f32 0.0, %v597
      %v599 = vpop.f32.mrb[0].mxu0
      %v600 = vpop.f32.mrb[0].mxu0
      %v601 = vadd.f32 0.0, %v600
      %v602 = vpop.f32.mrb[0].mxu0
      %603 = vmatprep.mubr.bf16.mxu0 0
      %604 = vmatmul.mubr.bf16.gmra.mrb[0].mxu0 %v510
      %v605 = vpop.f32.mrb[0].mxu0
      %v606 = vadd.f32 0.0, %v605
      %v607 = vpop.f32.mrb[0].mxu0
      %v608 = vpop.f32.mrb[0].mxu0
      %v609 = vadd.f32 0.0, %v608
      %v610 = vpop.f32.mrb[0].mxu0
      %611 = vmatprep.mubr.bf16.mxu0 0
      %612 = vmatmul.mubr.bf16.gmra.mrb[0].mxu0 %v513
      %v613 = vpop.f32.mrb[0].mxu0
      %v614 = vadd.f32 0.0, %v613
      %v615 = vpop.f32.mrb[0].mxu0
      %v616 = vpop.f32.mrb[0].mxu0
      %v617 = vadd.f32 0.0, %v616
      %v618 = vpop.f32.mrb[0].mxu0
      %619 = vmatprep.mubr.bf16.mxu0 0
      %620 = vmatmul.mubr.bf16.gmra.mrb[0].mxu0 %v516
      %v621 = vpop.f32.mrb[0].mxu0
      %v622 = vadd.f32 0.0, %v621
      %v623 = vpop.f32.mrb[0].mxu0
      %v624 = vpop.f32.mrb[0].mxu0
      %v625 = vadd.f32 0.0, %v624
      %v626 = vpop.f32.mrb[0].mxu0
      %627 = vmatprep.mubr.bf16.mxu0 0
      %628 = vmatmul.mubr.bf16.gmra.mrb[0].mxu0 %v519
      %v629 = vpop.f32.mrb[0].mxu0
      %v630 = vadd.f32 0.0, %v629
      %v631 = vpop.f32.mrb[0].mxu0
      %v632 = vpop.f32.mrb[0].mxu0
      %v633 = vadd.f32 0.0, %v632
      %v634 = vpop.f32.mrb[0].mxu0
      %635 = vmatprep.mubr.bf16.mxu0 0
      %636 = vmatmul.mubr.bf16.gmra.mrb[0].mxu0 %v522
      %v637 = vpop.f32.mrb[0].mxu0
      %v638 = vadd.f32 0.0, %v637
      %v639 = vpop.f32.mrb[0].mxu0
      %v640 = vpop.f32.mrb[0].mxu0
      %v641 = vadd.f32 0.0, %v640
      %v642 = vpop.f32.mrb[0].mxu0
      %643 = vmatprep.mubr.bf16.mxu0 0
      %644 = vmatmul.mubr.bf16.gmra.mrb[0].mxu0 %v525
      %v645 = vpop.f32.mrb[0].mxu0
      %v646 = vadd.f32 0.0, %v645
      %v647 = vpop.f32.mrb[0].mxu0
      %v648 = vpop.f32.mrb[0].mxu0
      %v649 = vadd.f32 0.0, %v648
      %v650 = vpop.f32.mrb[0].mxu0
      %651 = vmatprep.mubr.bf16.mxu0 0
      %652 = vmatmul.mubr.bf16.gmra.mrb[0].mxu0 %v528
      %v653 = vpop.f32.mrb[0].mxu0
      %v654 = vadd.f32 0.0, %v653
      %v655 = vpop.f32.mrb[0].mxu0
      %v656 = vpop.f32.mrb[0].mxu0
      %v657 = vadd.f32 0.0, %v656
      %v658 = vpop.f32.mrb[0].mxu0
      %659 = vmatprep.mubr.bf16.mxu0 0
      %660 = vmatmul.mubr.bf16.gmra.mrb[0].mxu0 %v531
      %v661 = vpop.f32.mrb[0].mxu0
      %v662 = vadd.f32 0.0, %v661
      %v663 = vpop.f32.mrb[0].mxu0
      %v664 = vpop.f32.mrb[0].mxu0
      %v665 = vadd.f32 0.0, %v664
      %v666 = vpop.f32.mrb[0].mxu0
      %667 = vmatprep.mubr.bf16.mxu0 0
      %668 = vmatmul.mubr.bf16.gmra.mrb[0].mxu0 %v534
      %v669 = vpop.f32.mrb[0].mxu0
      %v670 = vadd.f32 0.0, %v669
      %v671 = vpop.f32.mrb[0].mxu0
      %v672 = vpop.f32.mrb[0].mxu0
      %v673 = vadd.f32 0.0, %v672
      %v674 = vpop.f32.mrb[0].mxu0
      %675 = vmatprep.mubr.bf16.mxu0 0
      %676 = vmatmul.mubr.bf16.gmra.mrb[0].mxu0 %v537
      %v677 = vpop.f32.mrb[0].mxu0
      %v678 = vadd.f32 0.0, %v677
      %v679 = vpop.f32.mrb[0].mxu0
      %v680 = vpop.f32.mrb[0].mxu0
      %v681 = vadd.f32 0.0, %v680
      %v682 = vpop.f32.mrb[0].mxu0
      %683 = vmatprep.mubr.bf16.mxu0 0
      %684 = vmatmul.mubr.bf16.gmra.mrb[0].mxu0 %v540
      %v685 = vpop.f32.mrb[0].mxu0
      %v686 = vadd.f32 0.0, %v685
      %v687 = vpop.f32.mrb[0].mxu0
      %v688 = vpop.f32.mrb[0].mxu0
      %v689 = vadd.f32 0.0, %v688
      %v690 = vpop.f32.mrb[0].mxu0
      %691 = vmatprep.mubr.bf16.mxu0 0
      %692 = vmatmul.mubr.bf16.gmra.mrb[0].mxu0 %v543
      %v693 = vpop.f32.mrb[0].mxu0
      %v694 = vadd.f32 0.0, %v693
      %v695 = vpop.f32.mrb[0].mxu0
      %v696 = vpop.f32.mrb[0].mxu0
      %v697 = vadd.f32 0.0, %v696
      %v698 = vpop.f32.mrb[0].mxu0
      %699 = vmatprep.mubr.bf16.mxu0 0
      %700 = vmatmul.mubr.bf16.gmra.mrb[0].mxu0 %v546
      %v701 = vpop.f32.mrb[0].mxu0
      %v702 = vadd.f32 0.0, %v701
      %v703 = vpop.f32.mrb[0].mxu0
      %v704 = vpop.f32.mrb[0].mxu0
      %v705 = vadd.f32 0.0, %v704
      %v706 = vpop.f32.mrb[0].mxu0
      %707 = vmatprep.mubr.bf16.mxu0 0
      %708 = vmatmul.mubr.bf16.gmra.mrb[0].mxu0 %v549
      %v709 = vpop.f32.mrb[0].mxu0
      %v710 = vadd.f32 0.0, %v709
      %v711 = vpop.f32.mrb[0].mxu0
      %v712 = vpop.f32.mrb[0].mxu0
      %v713 = vadd.f32 0.0, %v712
      %v714 = vpop.f32.mrb[0].mxu0
      %715 = vdwg.mxu0
      %v716 = vadd.f32 %v338, %v590
      %v717 = vadd.f32 %v339, %v593
      %v718 = vadd.f32 %v340, %v598
      %v719 = vadd.f32 %v341, %v601
      %v720 = vadd.f32 %v342, %v606
      %v721 = vadd.f32 %v343, %v609
      %v722 = vadd.f32 %v344, %v614
      %v723 = vadd.f32 %v345, %v617
      %v724 = vadd.f32 %v346, %v622
      %v725 = vadd.f32 %v347, %v625
      %v726 = vadd.f32 %v348, %v630
      %v727 = vadd.f32 %v349, %v633
      %v728 = vadd.f32 %v350, %v638
      %v729 = vadd.f32 %v351, %v641
      %v730 = vadd.f32 %v352, %v646
      %v731 = vadd.f32 %v353, %v649
      %v732 = vadd.f32 %v354, %v654
      %v733 = vadd.f32 %v355, %v657
      %v734 = vadd.f32 %v356, %v662
      %v735 = vadd.f32 %v357, %v665
      %v736 = vadd.f32 %v358, %v670
      %v737 = vadd.f32 %v359, %v673
      %v738 = vadd.f32 %v360, %v678
      %v739 = vadd.f32 %v361, %v681
      %v740 = vadd.f32 %v362, %v686
      %v741 = vadd.f32 %v363, %v689
      %v742 = vadd.f32 %v364, %v694
      %v743 = vadd.f32 %v365, %v697
      %v744 = vadd.f32 %v366, %v702
      %v745 = vadd.f32 %v367, %v705
      %v746 = vadd.f32 %v368, %v710
      %v747 = vadd.f32 %v369, %v713
      %vm748 = vcmask 64512
      %749 = vst.msk [vmem:[#allocation2] sm:$0xff] %vm748, %v716
      %750 = vst.msk [vmem:[#allocation2 + $0x8] sm:$0xff] %vm748, %v717
      %751 = vst.msk [vmem:[#allocation2 + $0x10] sm:$0xff] %vm748, %v718
      %752 = vst.msk [vmem:[#allocation2 + $0x18] sm:$0xff] %vm748, %v719
      %753 = vst.msk [vmem:[#allocation2 + $0x20] sm:$0xff] %vm748, %v720
      %754 = vst.msk [vmem:[#allocation2 + $0x28] sm:$0xff] %vm748, %v721
      %755 = vst.msk [vmem:[#allocation2 + $0x30] sm:$0xff] %vm748, %v722
      %756 = vst.msk [vmem:[#allocation2 + $0x38] sm:$0xff] %vm748, %v723
      %757 = vst.msk [vmem:[#allocation2 + $0x40] sm:$0xff] %vm748, %v724
      %758 = vst.msk [vmem:[#allocation2 + $0x48] sm:$0xff] %vm748, %v725
      %759 = vst.msk [vmem:[#allocation2 + $0x50] sm:$0xff] %vm748, %v726
      %760 = vst.msk [vmem:[#allocation2 + $0x58] sm:$0xff] %vm748, %v727
      %761 = vst.msk [vmem:[#allocation2 + $0x60] sm:$0xff] %vm748, %v728
      %762 = vst.msk [vmem:[#allocation2 + $0x68] sm:$0xff] %vm748, %v729
      %763 = vst.msk [vmem:[#allocation2 + $0x70] sm:$0xff] %vm748, %v730
      %764 = vst.msk [vmem:[#allocation2 + $0x78] sm:$0xff] %vm748, %v731
      %765 = vst.msk [vmem:[#allocation2 + $0x80] sm:$0xff] %vm748, %v732
      %766 = vst.msk [vmem:[#allocation2 + $0x88] sm:$0xff] %vm748, %v733
      %767 = vst.msk [vmem:[#allocation2 + $0x90] sm:$0xff] %vm748, %v734
      %768 = vst.msk [vmem:[#allocation2 + $0x98] sm:$0xff] %vm748, %v735
      %769 = vst.msk [vmem:[#allocation2 + $0xa0] sm:$0xff] %vm748, %v736
      %770 = vst.msk [vmem:[#allocation2 + $0xa8] sm:$0xff] %vm748, %v737
      %771 = vst.msk [vmem:[#allocation2 + $0xb0] sm:$0xff] %vm748, %v738
      %772 = vst.msk [vmem:[#allocation2 + $0xb8] sm:$0xff] %vm748, %v739
      %773 = vst.msk [vmem:[#allocation2 + $0xc0] sm:$0xff] %vm748, %v740
      %774 = vst.msk [vmem:[#allocation2 + $0xc8] sm:$0xff] %vm748, %v741
      %775 = vst.msk [vmem:[#allocation2 + $0xd0] sm:$0xff] %vm748, %v742
      %776 = vst.msk [vmem:[#allocation2 + $0xd8] sm:$0xff] %vm748, %v743
      %777 = vst.msk [vmem:[#allocation2 + $0xe0] sm:$0xff] %vm748, %v744
      %778 = vst.msk [vmem:[#allocation2 + $0xe8] sm:$0xff] %vm748, %v745
      %779 = vst.msk [vmem:[#allocation2 + $0xf0] sm:$0xff] %vm748, %v746
      %780 = vst.msk [vmem:[#allocation2 + $0xf8] sm:$0xff] %vm748, %v747
      // Predicated region
      $region41: #{two_conv_block_forward.2} parent=35 // pred_check
        %p781 = pneg %p301
      $region42: #{two_conv_block_forward.2} parent=35 // pred_check_branch
        %783 = sbr.rel (%p781) target = $region44
      $region43: #{two_conv_block_forward.2} parent=35 // pred_region
        %v784 = vld [vmem:[#allocation2] sm:$0xff]
        %v785 = vld [vmem:[#allocation2 + $0x8] sm:$0xff]
        %v786 = vld [vmem:[#allocation2 + $0x10] sm:$0xff]
        %v787 = vld [vmem:[#allocation2 + $0x18] sm:$0xff]
        %v788 = vld [vmem:[#allocation2 + $0x20] sm:$0xff]
        %v789 = vld [vmem:[#allocation2 + $0x28] sm:$0xff]
        %v790 = vld [vmem:[#allocation2 + $0x30] sm:$0xff]
        %v791 = vld [vmem:[#allocation2 + $0x38] sm:$0xff]
        %v792 = vld [vmem:[#allocation2 + $0x40] sm:$0xff]
        %v793 = vld [vmem:[#allocation2 + $0x48] sm:$0xff]
        %v794 = vld [vmem:[#allocation2 + $0x50] sm:$0xff]
        %v795 = vld [vmem:[#allocation2 + $0x58] sm:$0xff]
        %v796 = vld [vmem:[#allocation2 + $0x60] sm:$0xff]
        %v797 = vld [vmem:[#allocation2 + $0x68] sm:$0xff]
        %v798 = vld [vmem:[#allocation2 + $0x70] sm:$0xff]
        %v799 = vld [vmem:[#allocation2 + $0x78] sm:$0xff]
        %v800 = vld [vmem:[#allocation2 + $0x80] sm:$0xff]
        %v801 = vld [vmem:[#allocation2 + $0x88] sm:$0xff]
        %v802 = vld [vmem:[#allocation2 + $0x90] sm:$0xff]
        %v803 = vld [vmem:[#allocation2 + $0x98] sm:$0xff]
        %v804 = vld [vmem:[#allocation2 + $0xa0] sm:$0xff]
        %v805 = vld [vmem:[#allocation2 + $0xa8] sm:$0xff]
        %v806 = vld [vmem:[#allocation2 + $0xb0] sm:$0xff]
        %v807 = vld [vmem:[#allocation2 + $0xb8] sm:$0xff]
        %v808 = vld [vmem:[#allocation2 + $0xc0] sm:$0xff]
        %v809 = vld [vmem:[#allocation2 + $0xc8] sm:$0xff]
        %v810 = vld [vmem:[#allocation2 + $0xd0] sm:$0xff]
        %v811 = vld [vmem:[#allocation2 + $0xd8] sm:$0xff]
        %v812 = vld [vmem:[#allocation2 + $0xe0] sm:$0xff]
        %v813 = vld [vmem:[#allocation2 + $0xe8] sm:$0xff]
        %v814 = vld [vmem:[#allocation2 + $0xf0] sm:$0xff]
        %v815 = vld [vmem:[#allocation2 + $0xf8] sm:$0xff]
        %v816 = vld [vmem:[%s287] sm:$0x1]
        %v818 = vlaneseq
        %v819 = vshrl.u32 %v818, 7
        %v820 = vsub.s32 0, %v819
        %v821 = vrot.slane %v816, %v820
        %v823 = vmul.f32 %v784, %v821
        %v824 = vmul.f32 %v785, %v821
        %v825 = vmul.f32 %v786, %v821
        %v826 = vmul.f32 %v787, %v821
        %v827 = vmul.f32 %v788, %v821
        %v828 = vmul.f32 %v789, %v821
        %v829 = vmul.f32 %v790, %v821
        %v830 = vmul.f32 %v791, %v821
        %v831 = vmul.f32 %v792, %v821
        %v832 = vmul.f32 %v793, %v821
        %v833 = vmul.f32 %v794, %v821
        %v834 = vmul.f32 %v795, %v821
        %v835 = vmul.f32 %v796, %v821
        %v836 = vmul.f32 %v797, %v821
        %v837 = vmul.f32 %v798, %v821
        %v838 = vmul.f32 %v799, %v821
        %v839 = vmul.f32 %v800, %v821
        %v840 = vmul.f32 %v801, %v821
        %v841 = vmul.f32 %v802, %v821
        %v842 = vmul.f32 %v803, %v821
        %v843 = vmul.f32 %v804, %v821
        %v844 = vmul.f32 %v805, %v821
        %v845 = vmul.f32 %v806, %v821
        %v846 = vmul.f32 %v807, %v821
        %v847 = vmul.f32 %v808, %v821
        %v848 = vmul.f32 %v809, %v821
        %v849 = vmul.f32 %v810, %v821
        %v850 = vmul.f32 %v811, %v821
        %v851 = vmul.f32 %v812, %v821
        %v852 = vmul.f32 %v813, %v821
        %v853 = vmul.f32 %v814, %v821
        %v854 = vmul.f32 %v815, %v821
        %v855 = vld [vmem:[%s290] sm:$0x1]
        %v857 = vlaneseq
        %v858 = vshrl.u32 %v857, 7
        %v859 = vsub.s32 0, %v858
        %v860 = vrot.slane %v855, %v859
        %v862 = vadd.f32 %v823, %v860
        %v863 = vadd.f32 %v824, %v860
        %v864 = vadd.f32 %v825, %v860
        %v865 = vadd.f32 %v826, %v860
        %v866 = vadd.f32 %v827, %v860
        %v867 = vadd.f32 %v828, %v860
        %v868 = vadd.f32 %v829, %v860
        %v869 = vadd.f32 %v830, %v860
        %v870 = vadd.f32 %v831, %v860
        %v871 = vadd.f32 %v832, %v860
        %v872 = vadd.f32 %v833, %v860
        %v873 = vadd.f32 %v834, %v860
        %v874 = vadd.f32 %v835, %v860
        %v875 = vadd.f32 %v836, %v860
        %v876 = vadd.f32 %v837, %v860
        %v877 = vadd.f32 %v838, %v860
        %v878 = vadd.f32 %v839, %v860
        %v879 = vadd.f32 %v840, %v860
        %v880 = vadd.f32 %v841, %v860
        %v881 = vadd.f32 %v842, %v860
        %v882 = vadd.f32 %v843, %v860
        %v883 = vadd.f32 %v844, %v860
        %v884 = vadd.f32 %v845, %v860
        %v885 = vadd.f32 %v846, %v860
        %v886 = vadd.f32 %v847, %v860
        %v887 = vadd.f32 %v848, %v860
        %v888 = vadd.f32 %v849, %v860
        %v889 = vadd.f32 %v850, %v860
        %v890 = vadd.f32 %v851, %v860
        %v891 = vadd.f32 %v852, %v860
        %v892 = vadd.f32 %v853, %v860
        %v893 = vadd.f32 %v854, %v860
        %v894 = vmax.f32 %v862, 0.0
        %v895 = vmax.f32 %v863, 0.0
        %v896 = vmax.f32 %v864, 0.0
        %v897 = vmax.f32 %v865, 0.0
        %v898 = vmax.f32 %v866, 0.0
        %v899 = vmax.f32 %v867, 0.0
        %v900 = vmax.f32 %v868, 0.0
        %v901 = vmax.f32 %v869, 0.0
        %v902 = vmax.f32 %v870, 0.0
        %v903 = vmax.f32 %v871, 0.0
        %v904 = vmax.f32 %v872, 0.0
        %v905 = vmax.f32 %v873, 0.0
        %v906 = vmax.f32 %v874, 0.0
        %v907 = vmax.f32 %v875, 0.0
        %v908 = vmax.f32 %v876, 0.0
        %v909 = vmax.f32 %v877, 0.0
        %v910 = vmax.f32 %v878, 0.0
        %v911 = vmax.f32 %v879, 0.0
        %v912 = vmax.f32 %v880, 0.0
        %v913 = vmax.f32 %v881, 0.0
        %v914 = vmax.f32 %v882, 0.0
        %v915 = vmax.f32 %v883, 0.0
        %v916 = vmax.f32 %v884, 0.0
        %v917 = vmax.f32 %v885, 0.0
        %v918 = vmax.f32 %v886, 0.0
        %v919 = vmax.f32 %v887, 0.0
        %v920 = vmax.f32 %v888, 0.0
        %v921 = vmax.f32 %v889, 0.0
        %v922 = vmax.f32 %v890, 0.0
        %v923 = vmax.f32 %v891, 0.0
        %v924 = vmax.f32 %v892, 0.0
        %v925 = vmax.f32 %v893, 0.0
        %v926 = vpack.c.bf16 %v895, %v894
        %v927 = vpack.c.bf16 %v897, %v896
        %v928 = vpack.c.bf16 %v899, %v898
        %v929 = vpack.c.bf16 %v901, %v900
        %v930 = vpack.c.bf16 %v903, %v902
        %v931 = vpack.c.bf16 %v905, %v904
        %v932 = vpack.c.bf16 %v907, %v906
        %v933 = vpack.c.bf16 %v909, %v908
        %v934 = vpack.c.bf16 %v911, %v910
        %v935 = vpack.c.bf16 %v913, %v912
        %v936 = vpack.c.bf16 %v915, %v914
        %v937 = vpack.c.bf16 %v917, %v916
        %v938 = vpack.c.bf16 %v919, %v918
        %v939 = vpack.c.bf16 %v921, %v920
        %v940 = vpack.c.bf16 %v923, %v922
        %v941 = vpack.c.bf16 %v925, %v924
        %v958 = vunpack.c.l.b16 %v926
        %v959 = vunpack.c.h.b16 %v926
        %v960 = vunpack.c.l.b16 %v927
        %v961 = vunpack.c.h.b16 %v927
        %v962 = vunpack.c.l.b16 %v928
        %v963 = vunpack.c.h.b16 %v928
        %v964 = vunpack.c.l.b16 %v929
        %v965 = vunpack.c.h.b16 %v929
        %v966 = vunpack.c.l.b16 %v930
        %v967 = vunpack.c.h.b16 %v930
        %v968 = vunpack.c.l.b16 %v931
        %v969 = vunpack.c.h.b16 %v931
        %v970 = vunpack.c.l.b16 %v932
        %v971 = vunpack.c.h.b16 %v932
        %v972 = vunpack.c.l.b16 %v933
        %v973 = vunpack.c.h.b16 %v933
        %v974 = vunpack.c.l.b16 %v934
        %v975 = vunpack.c.h.b16 %v934
        %v976 = vunpack.c.l.b16 %v935
        %v977 = vunpack.c.h.b16 %v935
        %v978 = vunpack.c.l.b16 %v936
        %v979 = vunpack.c.h.b16 %v936
        %v980 = vunpack.c.l.b16 %v937
        %v981 = vunpack.c.h.b16 %v937
        %v982 = vunpack.c.l.b16 %v938
        %v983 = vunpack.c.h.b16 %v938
        %v984 = vunpack.c.l.b16 %v939
        %v985 = vunpack.c.h.b16 %v939
        %v986 = vunpack.c.l.b16 %v940
        %v987 = vunpack.c.h.b16 %v940
        %v988 = vunpack.c.l.b16 %v941
        %v989 = vunpack.c.h.b16 %v941
        %v990 = vpack.c.b16 %v958, %v958
        %v991 = vpack.c.b16 %v959, %v959
        %v992 = vpack.c.b16 %v960, %v960
        %v993 = vpack.c.b16 %v961, %v961
        %v994 = vpack.c.b16 %v962, %v962
        %v995 = vpack.c.b16 %v963, %v963
        %v996 = vpack.c.b16 %v964, %v964
        %v997 = vpack.c.b16 %v965, %v965
        %v998 = vpack.c.b16 %v966, %v966
        %v999 = vpack.c.b16 %v967, %v967
        %v1000 = vpack.c.b16 %v968, %v968
        %v1001 = vpack.c.b16 %v969, %v969
        %v1002 = vpack.c.b16 %v970, %v970
        %v1003 = vpack.c.b16 %v971, %v971
        %v1004 = vpack.c.b16 %v972, %v972
        %v1005 = vpack.c.b16 %v973, %v973
        %v1006 = vpack.c.b16 %v974, %v974
        %v1007 = vpack.c.b16 %v975, %v975
        %v1008 = vpack.c.b16 %v976, %v976
        %v1009 = vpack.c.b16 %v977, %v977
        %v1010 = vpack.c.b16 %v978, %v978
        %v1011 = vpack.c.b16 %v979, %v979
        %v1012 = vpack.c.b16 %v980, %v980
        %v1013 = vpack.c.b16 %v981, %v981
        %v1014 = vpack.c.b16 %v982, %v982
        %v1015 = vpack.c.b16 %v983, %v983
        %v1016 = vpack.c.b16 %v984, %v984
        %v1017 = vpack.c.b16 %v985, %v985
        %v1018 = vpack.c.b16 %v986, %v986
        %v1019 = vpack.c.b16 %v987, %v987
        %v1020 = vpack.c.b16 %v988, %v988
        %v1021 = vpack.c.b16 %v989, %v989
        %vm1054 = vcmask 60416
        %1055 = vst.msk [vmem:[%s298] sm:$0xf] %vm1054, %v990
        %1056 = vst.msk [vmem:[%s298 + $0x4] sm:$0xf] %vm1054, %v991
        %1057 = vst.msk [vmem:[%s298 + $0x8] sm:$0xf] %vm1054, %v992
        %1058 = vst.msk [vmem:[%s298 + $0xc] sm:$0xf] %vm1054, %v993
        %1059 = vst.msk [vmem:[%s298 + $0x10] sm:$0xf] %vm1054, %v994
        %1060 = vst.msk [vmem:[%s298 + $0x14] sm:$0xf] %vm1054, %v995
        %1061 = vst.msk [vmem:[%s298 + $0x18] sm:$0xf] %vm1054, %v996
        %1062 = vst.msk [vmem:[%s298 + $0x1c] sm:$0xf] %vm1054, %v997
        %1063 = vst.msk [vmem:[%s298 + $0x20] sm:$0xf] %vm1054, %v998
        %1064 = vst.msk [vmem:[%s298 + $0x24] sm:$0xf] %vm1054, %v999
        %1065 = vst.msk [vmem:[%s298 + $0x28] sm:$0xf] %vm1054, %v1000
        %1066 = vst.msk [vmem:[%s298 + $0x2c] sm:$0xf] %vm1054, %v1001
        %1067 = vst.msk [vmem:[%s298 + $0x30] sm:$0xf] %vm1054, %v1002
        %1068 = vst.msk [vmem:[%s298 + $0x34] sm:$0xf] %vm1054, %v1003
        %1069 = vst.msk [vmem:[%s298 + $0x38] sm:$0xf] %vm1054, %v1004
        %1070 = vst.msk [vmem:[%s298 + $0x3c] sm:$0xf] %vm1054, %v1005
        %1071 = vst.msk [vmem:[%s298 + $0x40] sm:$0xf] %vm1054, %v1006
        %1072 = vst.msk [vmem:[%s298 + $0x44] sm:$0xf] %vm1054, %v1007
        %1073 = vst.msk [vmem:[%s298 + $0x48] sm:$0xf] %vm1054, %v1008
        %1074 = vst.msk [vmem:[%s298 + $0x4c] sm:$0xf] %vm1054, %v1009
        %1075 = vst.msk [vmem:[%s298 + $0x50] sm:$0xf] %vm1054, %v1010
        %1076 = vst.msk [vmem:[%s298 + $0x54] sm:$0xf] %vm1054, %v1011
        %1077 = vst.msk [vmem:[%s298 + $0x58] sm:$0xf] %vm1054, %v1012
        %1078 = vst.msk [vmem:[%s298 + $0x5c] sm:$0xf] %vm1054, %v1013
        %1079 = vst.msk [vmem:[%s298 + $0x60] sm:$0xf] %vm1054, %v1014
        %1080 = vst.msk [vmem:[%s298 + $0x64] sm:$0xf] %vm1054, %v1015
        %1081 = vst.msk [vmem:[%s298 + $0x68] sm:$0xf] %vm1054, %v1016
        %1082 = vst.msk [vmem:[%s298 + $0x6c] sm:$0xf] %vm1054, %v1017
        %1083 = vst.msk [vmem:[%s298 + $0x70] sm:$0xf] %vm1054, %v1018
        %1084 = vst.msk [vmem:[%s298 + $0x74] sm:$0xf] %vm1054, %v1019
        %1085 = vst.msk [vmem:[%s298 + $0x78] sm:$0xf] %vm1054, %v1020
        %1086 = vst.msk [vmem:[%s298 + $0x7c] sm:$0xf] %vm1054, %v1021
      $region44: #{two_conv_block_forward.2} parent=35 // pred_fallthru
        _
      %s1087 = smul.u32 32, %s20
      %p1088 = scmp.lt.s32.totalorder %s1087, 63
      %s1089 = scalar_select %p1088, %s1087, 63
      %p1090 = scmp.lt.s32.totalorder %s21, 0
      %s1091 = scalar_select %p1090, %s21, 0
      %s1092 = sadd.s32 %s1091, %s1089
      %s1093 = smul.addr %s1092, 4
      %s1094 = scalar_lea.vmem %s4, %s1093
      // Predicated region
      $region45: #{two_conv_block_forward.2} parent=35 // pred_check
        %p1095 = pneg %p162
      $region46: #{two_conv_block_forward.2} parent=35 // pred_check_branch
        %1097 = sbr.rel (%p1095) target = $region48
      $region47: #{two_conv_block_forward.2} parent=35 // pred_region
        %s1098 = smul.u32 32, %s20
      $region48: #{two_conv_block_forward.2} parent=35 // pred_fallthru
        _
    $region36: #{two_conv_block_forward.2} parent=5 // pred_fallthru
      _
    %p1099 = scmp.le.s32.totalorder 2, %s10
    // Predicated region
    $region49: #{two_conv_block_forward.2} parent=5 // pred_check
      %p1100 = pneg %p1099
    $region50: #{two_conv_block_forward.2} parent=5 // pred_check_branch
      %1102 = sbr.rel (%p1100) target = $region52
    $region51: #{two_conv_block_forward.2} parent=5 // pred_region
      %s1103 = ssub.s32 %s10, 2
      // Predicated region
      $region53: #{two_conv_block_forward.2} parent=51 // pred_check
        %p1104 = pneg %p168
      $region54: #{two_conv_block_forward.2} parent=51 // pred_check_branch
        %1106 = sbr.rel (%p1104) target = $region56
      $region55: #{two_conv_block_forward.2} parent=51 // pred_region
        %s1107 = smul.u32 32, %s23
        %p1108 = scmp.lt.s32.totalorder %s1107, 63
        %s1109 = scalar_select %p1108, %s1107, 63
        %p1110 = scmp.lt.s32.totalorder %s24, 0
        %s1111 = scalar_select %p1110, %s24, 0
        %s1112 = sadd.s32 %s1111, %s1109
        %s1113 = smul.addr %s1112, 4
        %s1114 = scalar_lea.vmem %s4, %s1113
      $region56: #{two_conv_block_forward.2} parent=51 // pred_fallthru
        _
    $region52: #{two_conv_block_forward.2} parent=5 // pred_fallthru
      _
  $region6: #{two_conv_block_forward.2} parent=0 // loop_footer
    %s14 = sadd.s32 1, %s10
  $region7: #{two_conv_block_forward.2} parent=0 // loop_footer_branch
    %9 = sbr.rel target = $region3
  $region8: #{two_conv_block_forward.2} parent=0 // loop_exit
    _

// kernel: two_conv_block_forward.3
$region0: #{two_conv_block_forward.3}
  #allocation0 [shape = 'u32[]', space=smem, size = 0x4, offset = 0x4, fixed_abs, tag = 'smem constant byte address 0x4 - core index']
  #allocation1 [shape = 'u32[144,128]{1,0:T(1,128)}', space=vmem, size = 0x12000, scoped, tag = 'internal scratch']
  #allocation2 [shape = 'f32[256,4]{1,0:T(8,128)}', space=vmem, size = 0x20000, scoped, tag = 'scratch operand']
  %s0 = inlined_call_operand.vmem [shape: bf16[512,72], index: 0, kind: input, shape index: {}]
  %s1 = inlined_call_operand.vmem [shape: bf16[72,4], index: 1, kind: input, shape index: {}]
  %s2 = inlined_call_operand.vmem [shape: f32[1,4], index: 2, kind: input, shape index: {}]
  %s3 = inlined_call_operand.vmem [shape: f32[1,4], index: 3, kind: input, shape index: {}]
  %s4 = inlined_call_operand.vmem [shape: f32[512,4], index: 4, kind: output, shape index: {}]
  %s5 = sld [smem:[#allocation0]]
  $region57: #{two_conv_block_forward.3} parent=0
    _
  %s7 = ssub.s32 1, %s5
  %s8 = scalar_select 0, %s7, %s5
  loop: start=0, step=1, limit=4
  $region2: #{two_conv_block_forward.3} parent=0 // loop_pre_header
    _
  $region3: #{two_conv_block_forward.3} parent=0 // loop_header
    %s10 = sphi 0, %s14
    %p11 = scmp.ge.s32.totalorder %s10, 4
    %s17 = sphi 0, %s36
    %s18 = sphi 0, %s32
    %s19 = sphi 0, %s28
    %s20 = sphi 0, %s17
    %s21 = sphi 0, %s18
    %s22 = sphi 0, %s19
    %s23 = sphi 0, %s20
    %s24 = sphi 0, %s21
    %s25 = sphi 0, %s22
    %s41 = sphi 0, %s43
    %s44 = sphi 0, %s41
    %s45 = sphi 0, %s44
    %s61 = sphi 0, %s45
    %s69 = sphi 0, %s71
    %s72 = sphi 0, %s69
    %s73 = sphi 0, %s72
    %s89 = sphi 0, %s73
    %s95 = sphi 0, %s97
    %s98 = sphi 0, %s95
    %s99 = sphi 0, %s98
    %s115 = sphi 0, %s99
    %s121 = sphi 0, %s123
    %s124 = sphi 0, %s121
    %s125 = sphi 0, %s124
    %s141 = sphi 0, %s125
    %s149 = sphi 0, %s151
    %s152 = sphi 0, %s149
    %s153 = sphi 0, %s152
    %s169 = sphi 0, %s153
  $region4: #{two_conv_block_forward.3} parent=0 // loop_header_branch
    %13 = sbr.rel (%p11) target = $region8
  $region5: #{two_conv_block_forward.3} parent=0 // loop_body
    %s15 = ssub.s32 %s10, 1
    %s16 = ssub.s32 %s10, 2
    %s26 = sadd.s32 1, %s19
    %p27 = scmp.ge.s32.totalorder %s26, 1
    %s28 = scalar_select %p27, 0, %s26
    %s29 = sadd.s32 1, %s18
    %s30 = scalar_select %p27, %s29, %s18
    %p31 = scmp.ge.s32.totalorder %s30, 1
    %s32 = scalar_select %p31, 0, %s30
    %s33 = sadd.s32 1, %s17
    %s34 = scalar_select %p31, %s33, %s17
    %p35 = scmp.ge.s32.totalorder %s34, 2
    %s36 = scalar_select %p35, 0, %s34
    %s37 = ssub.s32 %s17, %s36
    %s38 = ssub.s32 %s19, %s28
    %s39 = sor.u32 %s37, %s38
    %p40 = scmp.eq.s32.totalorder %s39, 0
    %s42 = sadd.s32 %s41, 1
    %s43 = scalar_select %p40, %s41, %s42
    %p46 = pneg %p40
    %p47 = scmp.eq.s32.totalorder %s10, 1
    %p48 = por %p46, %p47
    %p49 = scmp.ne.s32.totalorder %s41, %s44
    %p50 = scmp.eq.s32.totalorder %s10, 0
    %p51 = por %p49, %p50
    %p52 = scmp.ne.s32.totalorder %s41, %s44
    %p53 = scmp.eq.s32.totalorder %s15, 1
    %p54 = por %p52, %p53
    %p55 = scmp.ne.s32.totalorder %s44, %s45
    %p56 = scmp.eq.s32.totalorder %s15, 0
    %p57 = por %p55, %p56
    %p58 = scmp.ne.s32.totalorder %s44, %s45
    %p59 = scmp.eq.s32.totalorder %s16, 1
    %p60 = por %p58, %p59
    %p62 = scmp.ne.s32.totalorder %s45, %s61
    %p63 = scmp.eq.s32.totalorder %s16, 0
    %p64 = por %p62, %p63
    %s65 = ssub.s32 %s19, %s28
    %s66 = ssub.s32 %s18, %s32
    %s67 = sor.u32 %s65, %s66
    %p68 = scmp.eq.s32.totalorder %s67, 0
    %s70 = sadd.s32 %s69, 1
    %s71 = scalar_select %p68, %s69, %s70
    %p74 = pneg %p68
    %p75 = scmp.eq.s32.totalorder %s10, 1
    %p76 = por %p74, %p75
    %p77 = scmp.ne.s32.totalorder %s69, %s72
    %p78 = scmp.eq.s32.totalorder %s10, 0
    %p79 = por %p77, %p78
    %p80 = scmp.ne.s32.totalorder %s69, %s72
    %p81 = scmp.eq.s32.totalorder %s15, 1
    %p82 = por %p80, %p81
    %p83 = scmp.ne.s32.totalorder %s72, %s73
    %p84 = scmp.eq.s32.totalorder %s15, 0
    %p85 = por %p83, %p84
    %p86 = scmp.ne.s32.totalorder %s72, %s73
    %p87 = scmp.eq.s32.totalorder %s16, 1
    %p88 = por %p86, %p87
    %p90 = scmp.ne.s32.totalorder %s73, %s89
    %p91 = scmp.eq.s32.totalorder %s16, 0
    %p92 = por %p90, %p91
    %s93 = ssub.s32 %s18, %s32
    %p94 = scmp.eq.s32.totalorder %s93, 0
    %s96 = sadd.s32 %s95, 1
    %s97 = scalar_select %p94, %s95, %s96
    %p100 = pneg %p94
    %p101 = scmp.eq.s32.totalorder %s10, 1
    %p102 = por %p100, %p101
    %p103 = scmp.ne.s32.totalorder %s95, %s98
    %p104 = scmp.eq.s32.totalorder %s10, 0
    %p105 = por %p103, %p104
    %p106 = scmp.ne.s32.totalorder %s95, %s98
    %p107 = scmp.eq.s32.totalorder %s15, 1
    %p108 = por %p106, %p107
    %p109 = scmp.ne.s32.totalorder %s98, %s99
    %p110 = scmp.eq.s32.totalorder %s15, 0
    %p111 = por %p109, %p110
    %p112 = scmp.ne.s32.totalorder %s98, %s99
    %p113 = scmp.eq.s32.totalorder %s16, 1
    %p114 = por %p112, %p113
    %p116 = scmp.ne.s32.totalorder %s99, %s115
    %p117 = scmp.eq.s32.totalorder %s16, 0
    %p118 = por %p116, %p117
    %s119 = ssub.s32 %s18, %s32
    %p120 = scmp.eq.s32.totalorder %s119, 0
    %s122 = sadd.s32 %s121, 1
    %s123 = scalar_select %p120, %s121, %s122
    %p126 = pneg %p120
    %p127 = scmp.eq.s32.totalorder %s10, 1
    %p128 = por %p126, %p127
    %p129 = scmp.ne.s32.totalorder %s121, %s124
    %p130 = scmp.eq.s32.totalorder %s10, 0
    %p131 = por %p129, %p130
    %p132 = scmp.ne.s32.totalorder %s121, %s124
    %p133 = scmp.eq.s32.totalorder %s15, 1
    %p134 = por %p132, %p133
    %p135 = scmp.ne.s32.totalorder %s124, %s125
    %p136 = scmp.eq.s32.totalorder %s15, 0
    %p137 = por %p135, %p136
    %p138 = scmp.ne.s32.totalorder %s124, %s125
    %p139 = scmp.eq.s32.totalorder %s16, 1
    %p140 = por %p138, %p139
    %p142 = scmp.ne.s32.totalorder %s125, %s141
    %p143 = scmp.eq.s32.totalorder %s16, 0
    %p144 = por %p142, %p143
    %s145 = ssub.s32 %s17, %s36
    %s146 = ssub.s32 %s18, %s32
    %s147 = sor.u32 %s145, %s146
    %p148 = scmp.eq.s32.totalorder %s147, 0
    %s150 = sadd.s32 %s149, 1
    %s151 = scalar_select %p148, %s149, %s150
    %p154 = pneg %p148
    %p155 = scmp.eq.s32.totalorder %s10, 1
    %p156 = por %p154, %p155
    %p157 = scmp.ne.s32.totalorder %s149, %s152
    %p158 = scmp.eq.s32.totalorder %s10, 0
    %p159 = por %p157, %p158
    %p160 = scmp.ne.s32.totalorder %s149, %s152
    %p161 = scmp.eq.s32.totalorder %s15, 1
    %p162 = por %p160, %p161
    %p163 = scmp.ne.s32.totalorder %s152, %s153
    %p164 = scmp.eq.s32.totalorder %s15, 0
    %p165 = por %p163, %p164
    %p166 = scmp.ne.s32.totalorder %s152, %s153
    %p167 = scmp.eq.s32.totalorder %s16, 1
    %p168 = por %p166, %p167
    %p170 = scmp.ne.s32.totalorder %s153, %s169
    %p171 = scmp.eq.s32.totalorder %s16, 0
    %p172 = por %p170, %p171
    %p173 = scmp.le.s32.totalorder 1, %s10
    %p174 = scmp.lt.s32.totalorder %s10, 3
    %p175 = pnand %p173, %p174
    %p176 = pneg %p175
    // Predicated region
    $region9: #{two_conv_block_forward.3} parent=5 // pred_check
      _
    $region10: #{two_conv_block_forward.3} parent=5 // pred_check_branch
      %178 = sbr.rel (%p175) target = $region12
    $region11: #{two_conv_block_forward.3} parent=5 // pred_region
      %s179 = ssub.s32 %s10, 1
      // Predicated region
      $region13: #{two_conv_block_forward.3} parent=11 // pred_check
        %p180 = pneg %p85
      $region14: #{two_conv_block_forward.3} parent=11 // pred_check_branch
        %182 = sbr.rel (%p180) target = $region16
      $region15: #{two_conv_block_forward.3} parent=11 // pred_region
        %s183 = smul.u32 9, %s22
        %p184 = scmp.lt.s32.totalorder %s183, 8
        %s185 = scalar_select %p184, %s183, 8
        %p186 = scmp.lt.s32.totalorder %s21, 0
        %s187 = scalar_select %p186, %s21, 0
        %s188 = sadd.s32 %s187, %s185
        %s189 = smul.addr %s188, 4
        %s190 = scalar_lea.vmem %s1, %s189
        %s191 = smul.u32 9, %s22
      $region16: #{two_conv_block_forward.3} parent=11 // pred_fallthru
        _
      // Predicated region
      $region17: #{two_conv_block_forward.3} parent=11 // pred_check
        %p192 = pneg %p111
      $region18: #{two_conv_block_forward.3} parent=11 // pred_check_branch
        %194 = sbr.rel (%p192) target = $region20
      $region19: #{two_conv_block_forward.3} parent=11 // pred_region
        %p195 = scmp.lt.s32.totalorder %s21, 0
        %s196 = scalar_select %p195, %s21, 0
        %s197 = scalar_lea.vmem %s2, %s196
      $region20: #{two_conv_block_forward.3} parent=11 // pred_fallthru
        _
      // Predicated region
      $region21: #{two_conv_block_forward.3} parent=11 // pred_check
        %p198 = pneg %p137
      $region22: #{two_conv_block_forward.3} parent=11 // pred_check_branch
        %200 = sbr.rel (%p198) target = $region24
      $region23: #{two_conv_block_forward.3} parent=11 // pred_region
        %p201 = scmp.lt.s32.totalorder %s21, 0
        %s202 = scalar_select %p201, %s21, 0
        %s203 = scalar_lea.vmem %s3, %s202
      $region24: #{two_conv_block_forward.3} parent=11 // pred_fallthru
        _
    $region12: #{two_conv_block_forward.3} parent=5 // pred_fallthru
      _
    %p204 = scmp.lt.s32.totalorder %s10, 2
    // Predicated region
    $region25: #{two_conv_block_forward.3} parent=5 // pred_check
      %p205 = pneg %p204
    $region26: #{two_conv_block_forward.3} parent=5 // pred_check_branch
      %207 = sbr.rel (%p205) target = $region28
    $region27: #{two_conv_block_forward.3} parent=5 // pred_region
      // Predicated region
      $region29: #{two_conv_block_forward.3} parent=27 // pred_check
        %p208 = pneg %p51
      $region30: #{two_conv_block_forward.3} parent=27 // pred_check_branch
        %210 = sbr.rel (%p208) target = $region32
      $region31: #{two_conv_block_forward.3} parent=27 // pred_region
        %s211 = smul.u32 32, %s17
        %p212 = scmp.lt.s32.totalorder %s211, 63
        %s213 = scalar_select %p212, %s211, 63
        %p214 = scmp.lt.s32.totalorder %s19, 0
        %s215 = scalar_select %p214, %s19, 0
        %s216 = sadd.s32 %s215, %s213
        %s217 = smul.addr %s216, 4
        %s218 = scalar_lea.vmem %s0, %s217
        %s219 = smul.u32 32, %s17
      $region32: #{two_conv_block_forward.3} parent=27 // pred_fallthru
        _
    $region28: #{two_conv_block_forward.3} parent=5 // pred_fallthru
      _
    %p220 = scmp.le.s32.totalorder 1, %s10
    %p221 = scmp.lt.s32.totalorder %s10, 3
    %p222 = pnand %p220, %p221
    %p223 = pneg %p222
    // Predicated region
    $region33: #{two_conv_block_forward.3} parent=5 // pred_check
      _
    $region34: #{two_conv_block_forward.3} parent=5 // pred_check_branch
      %225 = sbr.rel (%p222) target = $region36
    $region35: #{two_conv_block_forward.3} parent=5 // pred_region
      %s226 = ssub.s32 %s10, 1
      %s227 = smul.u32 32, %s20
      %p228 = scmp.lt.s32.totalorder %s227, 63
      %s229 = scalar_select %p228, %s227, 63
      %p230 = scmp.lt.s32.totalorder %s22, 0
      %s231 = scalar_select %p230, %s22, 0
      %s232 = sadd.s32 %s231, %s229
      %s233 = smul.addr %s232, 4
      %s234 = scalar_lea.vmem %s0, %s233
      %p235 = pneg %p57
      %p236 = pneg %p54
      %s237 = smul.u32 9, %s22
      %p238 = scmp.lt.s32.totalorder %s237, 8
      %s239 = scalar_select %p238, %s237, 8
      %p240 = scmp.lt.s32.totalorder %s21, 0
      %s241 = scalar_select %p240, %s21, 0
      %s242 = sadd.s32 %s241, %s239
      %s243 = smul.addr %s242, 4
      %s244 = scalar_lea.vmem %s1, %s243
      %p245 = pneg %p85
      %p246 = pneg %p82
      %p247 = scmp.lt.s32.totalorder %s21, 0
      %s248 = scalar_select %p247, %s21, 0
      %s249 = scalar_lea.vmem %s2, %s248
      %p250 = pneg %p111
      %p251 = pneg %p108
      %p252 = scmp.lt.s32.totalorder %s21, 0
      %s253 = scalar_select %p252, %s21, 0
      %s254 = scalar_lea.vmem %s3, %s253
      %p255 = pneg %p137
      %p256 = pneg %p134
      %p257 = pneg %p165
      %p258 = pneg %p162
      %s259 = smul.u32 32, %s20
      %p260 = scmp.lt.s32.totalorder %s259, 63
      %s261 = scalar_select %p260, %s259, 63
      %p262 = scmp.lt.s32.totalorder %s21, 0
      %s263 = scalar_select %p262, %s21, 0
      %s264 = sadd.s32 %s263, %s261
      %s265 = smul.addr %s264, 8
      %s266 = scalar_lea.vmem %s4, %s265
      %s267 = smul.u32 32, %s20
      %p268 = scmp.lt.s32.totalorder %s267, 63
      %s269 = scalar_select %p268, %s267, 63
      %p270 = scmp.lt.s32.totalorder %s22, 0
      %s271 = scalar_select %p270, %s22, 0
      %s272 = sadd.s32 %s271, %s269
      %s273 = smul.addr %s272, 4
      %s274 = scalar_lea.vmem %s0, %s273
      %s275 = smul.u32 32, %s20
      %s276 = smul.u32 9, %s22
      %p277 = scmp.lt.s32.totalorder %s276, 8
      %s278 = scalar_select %p277, %s276, 8
      %p279 = scmp.lt.s32.totalorder %s21, 0
      %s280 = scalar_select %p279, %s21, 0
      %s281 = sadd.s32 %s280, %s278
      %s282 = smul.addr %s281, 4
      %s283 = scalar_lea.vmem %s1, %s282
      %s284 = smul.u32 9, %s22
      %p285 = scmp.lt.s32.totalorder %s21, 0
      %s286 = scalar_select %p285, %s21, 0
      %s287 = scalar_lea.vmem %s2, %s286
      %p288 = scmp.lt.s32.totalorder %s21, 0
      %s289 = scalar_select %p288, %s21, 0
      %s290 = scalar_lea.vmem %s3, %s289
      %s291 = smul.u32 32, %s20
      %p292 = scmp.lt.s32.totalorder %s291, 63
      %s293 = scalar_select %p292, %s291, 63
      %p294 = scmp.lt.s32.totalorder %s21, 0
      %s295 = scalar_select %p294, %s21, 0
      %s296 = sadd.s32 %s295, %s293
      %s297 = smul.addr %s296, 8
      %s298 = scalar_lea.vmem %s4, %s297
      %s299 = smul.u32 32, %s20
      %p301 = scmp.eq.s32.totalorder %s22, 0
      // Predicated region
      $region37: #{two_conv_block_forward.3} parent=35 // pred_check
        %p302 = pneg %p301
      $region38: #{two_conv_block_forward.3} parent=35 // pred_check_branch
        %304 = sbr.rel (%p302) target = $region40
      $region39: #{two_conv_block_forward.3} parent=35 // pred_region
        %vm305 = vcmask 31744
        %306 = vst.msk [vmem:[#allocation2] sm:$0xff] %vm305, 0.0
        %307 = vst.msk [vmem:[#allocation2 + $0x8] sm:$0xff] %vm305, 0.0
        %308 = vst.msk [vmem:[#allocation2 + $0x10] sm:$0xff] %vm305, 0.0
        %309 = vst.msk [vmem:[#allocation2 + $0x18] sm:$0xff] %vm305, 0.0
        %310 = vst.msk [vmem:[#allocation2 + $0x20] sm:$0xff] %vm305, 0.0
        %311 = vst.msk [vmem:[#allocation2 + $0x28] sm:$0xff] %vm305, 0.0
        %312 = vst.msk [vmem:[#allocation2 + $0x30] sm:$0xff] %vm305, 0.0
        %313 = vst.msk [vmem:[#allocation2 + $0x38] sm:$0xff] %vm305, 0.0
        %314 = vst.msk [vmem:[#allocation2 + $0x40] sm:$0xff] %vm305, 0.0
        %315 = vst.msk [vmem:[#allocation2 + $0x48] sm:$0xff] %vm305, 0.0
        %316 = vst.msk [vmem:[#allocation2 + $0x50] sm:$0xff] %vm305, 0.0
        %317 = vst.msk [vmem:[#allocation2 + $0x58] sm:$0xff] %vm305, 0.0
        %318 = vst.msk [vmem:[#allocation2 + $0x60] sm:$0xff] %vm305, 0.0
        %319 = vst.msk [vmem:[#allocation2 + $0x68] sm:$0xff] %vm305, 0.0
        %320 = vst.msk [vmem:[#allocation2 + $0x70] sm:$0xff] %vm305, 0.0
        %321 = vst.msk [vmem:[#allocation2 + $0x78] sm:$0xff] %vm305, 0.0
        %322 = vst.msk [vmem:[#allocation2 + $0x80] sm:$0xff] %vm305, 0.0
        %323 = vst.msk [vmem:[#allocation2 + $0x88] sm:$0xff] %vm305, 0.0
        %324 = vst.msk [vmem:[#allocation2 + $0x90] sm:$0xff] %vm305, 0.0
        %325 = vst.msk [vmem:[#allocation2 + $0x98] sm:$0xff] %vm305, 0.0
        %326 = vst.msk [vmem:[#allocation2 + $0xa0] sm:$0xff] %vm305, 0.0
        %327 = vst.msk [vmem:[#allocation2 + $0xa8] sm:$0xff] %vm305, 0.0
        %328 = vst.msk [vmem:[#allocation2 + $0xb0] sm:$0xff] %vm305, 0.0
        %329 = vst.msk [vmem:[#allocation2 + $0xb8] sm:$0xff] %vm305, 0.0
        %330 = vst.msk [vmem:[#allocation2 + $0xc0] sm:$0xff] %vm305, 0.0
        %331 = vst.msk [vmem:[#allocation2 + $0xc8] sm:$0xff] %vm305, 0.0
        %332 = vst.msk [vmem:[#allocation2 + $0xd0] sm:$0xff] %vm305, 0.0
        %333 = vst.msk [vmem:[#allocation2 + $0xd8] sm:$0xff] %vm305, 0.0
        %334 = vst.msk [vmem:[#allocation2 + $0xe0] sm:$0xff] %vm305, 0.0
        %335 = vst.msk [vmem:[#allocation2 + $0xe8] sm:$0xff] %vm305, 0.0
        %336 = vst.msk [vmem:[#allocation2 + $0xf0] sm:$0xff] %vm305, 0.0
        %337 = vst.msk [vmem:[#allocation2 + $0xf8] sm:$0xff] %vm305, 0.0
      $region40: #{two_conv_block_forward.3} parent=35 // pred_fallthru
        _
      %v338 = vld [vmem:[#allocation2] sm:$0xff]
      %v339 = vld [vmem:[#allocation2 + $0x8] sm:$0xff]
      %v340 = vld [vmem:[#allocation2 + $0x10] sm:$0xff]
      %v341 = vld [vmem:[#allocation2 + $0x18] sm:$0xff]
      %v342 = vld [vmem:[#allocation2 + $0x20] sm:$0xff]
      %v343 = vld [vmem:[#allocation2 + $0x28] sm:$0xff]
      %v344 = vld [vmem:[#allocation2 + $0x30] sm:$0xff]
      %v345 = vld [vmem:[#allocation2 + $0x38] sm:$0xff]
      %v346 = vld [vmem:[#allocation2 + $0x40] sm:$0xff]
      %v347 = vld [vmem:[#allocation2 + $0x48] sm:$0xff]
      %v348 = vld [vmem:[#allocation2 + $0x50] sm:$0xff]
      %v349 = vld [vmem:[#allocation2 + $0x58] sm:$0xff]
      %v350 = vld [vmem:[#allocation2 + $0x60] sm:$0xff]
      %v351 = vld [vmem:[#allocation2 + $0x68] sm:$0xff]
      %v352 = vld [vmem:[#allocation2 + $0x70] sm:$0xff]
      %v353 = vld [vmem:[#allocation2 + $0x78] sm:$0xff]
      %v354 = vld [vmem:[#allocation2 + $0x80] sm:$0xff]
      %v355 = vld [vmem:[#allocation2 + $0x88] sm:$0xff]
      %v356 = vld [vmem:[#allocation2 + $0x90] sm:$0xff]
      %v357 = vld [vmem:[#allocation2 + $0x98] sm:$0xff]
      %v358 = vld [vmem:[#allocation2 + $0xa0] sm:$0xff]
      %v359 = vld [vmem:[#allocation2 + $0xa8] sm:$0xff]
      %v360 = vld [vmem:[#allocation2 + $0xb0] sm:$0xff]
      %v361 = vld [vmem:[#allocation2 + $0xb8] sm:$0xff]
      %v362 = vld [vmem:[#allocation2 + $0xc0] sm:$0xff]
      %v363 = vld [vmem:[#allocation2 + $0xc8] sm:$0xff]
      %v364 = vld [vmem:[#allocation2 + $0xd0] sm:$0xff]
      %v365 = vld [vmem:[#allocation2 + $0xd8] sm:$0xff]
      %v366 = vld [vmem:[#allocation2 + $0xe0] sm:$0xff]
      %v367 = vld [vmem:[#allocation2 + $0xe8] sm:$0xff]
      %v368 = vld [vmem:[#allocation2 + $0xf0] sm:$0xff]
      %v369 = vld [vmem:[#allocation2 + $0xf8] sm:$0xff]
      %v370 = vld [vmem:[%s274] sm:$0xf]
      %v371 = vld [vmem:[%s274 + $0x4] sm:$0xf]
      %v372 = vld [vmem:[%s274 + $0x8] sm:$0xf]
      %v373 = vld [vmem:[%s274 + $0xc] sm:$0xf]
      %v374 = vld [vmem:[%s274 + $0x10] sm:$0xf]
      %v375 = vld [vmem:[%s274 + $0x14] sm:$0xf]
      %v376 = vld [vmem:[%s274 + $0x18] sm:$0xf]
      %v377 = vld [vmem:[%s274 + $0x1c] sm:$0xf]
      %v378 = vld [vmem:[%s274 + $0x20] sm:$0xf]
      %v379 = vld [vmem:[%s274 + $0x24] sm:$0xf]
      %v380 = vld [vmem:[%s274 + $0x28] sm:$0xf]
      %v381 = vld [vmem:[%s274 + $0x2c] sm:$0xf]
      %v382 = vld [vmem:[%s274 + $0x30] sm:$0xf]
      %v383 = vld [vmem:[%s274 + $0x34] sm:$0xf]
      %v384 = vld [vmem:[%s274 + $0x38] sm:$0xf]
      %v385 = vld [vmem:[%s274 + $0x3c] sm:$0xf]
      %v386 = vld [vmem:[%s274 + $0x40] sm:$0xf]
      %v387 = vld [vmem:[%s274 + $0x44] sm:$0xf]
      %v388 = vld [vmem:[%s274 + $0x48] sm:$0xf]
      %v389 = vld [vmem:[%s274 + $0x4c] sm:$0xf]
      %v390 = vld [vmem:[%s274 + $0x50] sm:$0xf]
      %v391 = vld [vmem:[%s274 + $0x54] sm:$0xf]
      %v392 = vld [vmem:[%s274 + $0x58] sm:$0xf]
      %v393 = vld [vmem:[%s274 + $0x5c] sm:$0xf]
      %v394 = vld [vmem:[%s274 + $0x60] sm:$0xf]
      %v395 = vld [vmem:[%s274 + $0x64] sm:$0xf]
      %v396 = vld [vmem:[%s274 + $0x68] sm:$0xf]
      %v397 = vld [vmem:[%s274 + $0x6c] sm:$0xf]
      %v398 = vld [vmem:[%s274 + $0x70] sm:$0xf]
      %v399 = vld [vmem:[%s274 + $0x74] sm:$0xf]
      %v400 = vld [vmem:[%s274 + $0x78] sm:$0xf]
      %v401 = vld [vmem:[%s274 + $0x7c] sm:$0xf]
      %v402 = vld [vmem:[%s283] sm:$0xf]
      %v403 = vld [vmem:[%s283 + $0x4] sm:$0xf]
      %v404 = vld [vmem:[%s283 + $0x8] sm:$0xf]
      %v405 = vld [vmem:[%s283 + $0xc] sm:$0xf]
      %v406 = vld [vmem:[%s283 + $0x10] sm:$0xf]
      %v407 = vld [vmem:[%s283 + $0x14] sm:$0xf]
      %v408 = vld [vmem:[%s283 + $0x18] sm:$0xf]
      %v409 = vld [vmem:[%s283 + $0x1c] sm:$0xf]
      %v410 = vld [vmem:[%s283 + $0x20] sm:$0xf]
      %v443 = vunpack.c.l.b16 %v370
      %v444 = vunpack.c.l.b16 %v371
      %v445 = vunpack.c.l.b16 %v372
      %v446 = vunpack.c.l.b16 %v373
      %v447 = vunpack.c.l.b16 %v374
      %v448 = vunpack.c.l.b16 %v375
      %v449 = vunpack.c.l.b16 %v376
      %v450 = vunpack.c.l.b16 %v377
      %v451 = vunpack.c.l.b16 %v378
      %v452 = vunpack.c.l.b16 %v379
      %v453 = vunpack.c.l.b16 %v380
      %v454 = vunpack.c.l.b16 %v381
      %v455 = vunpack.c.l.b16 %v382
      %v456 = vunpack.c.l.b16 %v383
      %v457 = vunpack.c.l.b16 %v384
      %v458 = vunpack.c.l.b16 %v385
      %v459 = vunpack.c.l.b16 %v386
      %v460 = vunpack.c.l.b16 %v387
      %v461 = vunpack.c.l.b16 %v388
      %v462 = vunpack.c.l.b16 %v389
      %v463 = vunpack.c.l.b16 %v390
      %v464 = vunpack.c.l.b16 %v391
      %v465 = vunpack.c.l.b16 %v392
      %v466 = vunpack.c.l.b16 %v393
      %v467 = vunpack.c.l.b16 %v394
      %v468 = vunpack.c.l.b16 %v395
      %v469 = vunpack.c.l.b16 %v396
      %v470 = vunpack.c.l.b16 %v397
      %v471 = vunpack.c.l.b16 %v398
      %v472 = vunpack.c.l.b16 %v399
      %v473 = vunpack.c.l.b16 %v400
      %v474 = vunpack.c.l.b16 %v401
      %v475 = vpack.c.b16 %v444, %v443
      %v476 = vpack.c.b16 %v446, %v445
      %v477 = vpack.c.b16 %v448, %v447
      %v478 = vpack.c.b16 %v450, %v449
      %v479 = vpack.c.b16 %v452, %v451
      %v480 = vpack.c.b16 %v454, %v453
      %v481 = vpack.c.b16 %v456, %v455
      %v482 = vpack.c.b16 %v458, %v457
      %v483 = vpack.c.b16 %v460, %v459
      %v484 = vpack.c.b16 %v462, %v461
      %v485 = vpack.c.b16 %v464, %v463
      %v486 = vpack.c.b16 %v466, %v465
      %v487 = vpack.c.b16 %v468, %v467
      %v488 = vpack.c.b16 %v470, %v469
      %v489 = vpack.c.b16 %v472, %v471
      %v490 = vpack.c.b16 %v474, %v473
      %v500 = vunpack.c.l.b16 %v402
      %v501 = vunpack.c.l.b16 %v403
      %v502 = vunpack.c.l.b16 %v404
      %v503 = vunpack.c.l.b16 %v405
      %v504 = vunpack.c.l.b16 %v406
      %v505 = vunpack.c.l.b16 %v407
      %v506 = vunpack.c.l.b16 %v408
      %v507 = vunpack.c.l.b16 %v409
      %v508 = vunpack.c.l.b16 %v410
      %v509 = vpack.c.b16 %v501, %v500
      %v510 = vpack.c.b16 %v503, %v502
      %v511 = vpack.c.b16 %v505, %v504
      %v512 = vpack.c.b16 %v507, %v506
      %v513 = vpack.c.b16 %v508, %v508
      %vm518 = vcmask 588800
      %v520 = vsel %vm518, %v475, 0
      %v523 = vsel %vm518, %v476, 0
      %v526 = vsel %vm518, %v477, 0
      %v529 = vsel %vm518, %v478, 0
      %v532 = vsel %vm518, %v479, 0
      %v535 = vsel %vm518, %v480, 0
      %v538 = vsel %vm518, %v481, 0
      %v541 = vsel %vm518, %v482, 0
      %v544 = vsel %vm518, %v483, 0
      %v547 = vsel %vm518, %v484, 0
      %v550 = vsel %vm518, %v485, 0
      %v553 = vsel %vm518, %v486, 0
      %v556 = vsel %vm518, %v487, 0
      %v559 = vsel %vm518, %v488, 0
      %v562 = vsel %vm518, %v489, 0
      %v565 = vsel %vm518, %v490, 0
      %vm567 = vcmask 1043456
      %v569 = vsel %vm567, %v513, 0
      %571 = vmatprep.subr.bf16.mxu0 0
      %572 = vmatpush1.bf16.msra.mxu0 %v509
      %573 = vmatprep.subr.bf16.mxu0 0
      %574 = vmatpush1.bf16.msra.mxu0 %v510
      %575 = vmatprep.subr.bf16.mxu0 0
      %576 = vmatpush1.bf16.msra.mxu0 %v511
      %577 = vmatprep.subr.bf16.mxu0 0
      %578 = vmatpush1.bf16.msra.mxu0 %v512
      %579 = vmatprep.subr.bf16.mxu0 0
      %580 = vmatpush1.bf16.msra.mxu0 %v569
      %581 = vmatprep.subr.bf16.mxu0 0
      %582 = vmatpush1.bf16.msra.mxu0 0
      %583 = vmatprep.subr.bf16.mxu0 0
      %584 = vmatpush1.bf16.msra.mxu0 0
      %585 = vmatprep.subr.bf16.mxu0 0
      %586 = vmatpush1.bf16.msra.mxu0 0
      %587 = vmatprep.subr.bf16.mxu0 0
      %588 = vmatpush1.bf16.msra.mxu0 0
      %589 = vmatprep.subr.bf16.mxu0 0
      %590 = vmatpush1.bf16.msra.mxu0 0
      %591 = vmatprep.subr.bf16.mxu0 0
      %592 = vmatpush1.bf16.msra.mxu0 0
      %593 = vmatprep.subr.bf16.mxu0 0
      %594 = vmatpush1.bf16.msra.mxu0 0
      %595 = vmatprep.subr.bf16.mxu0 0
      %596 = vmatpush1.bf16.msra.mxu0 0
      %597 = vmatprep.subr.bf16.mxu0 0
      %598 = vmatpush1.bf16.msra.mxu0 0
      %599 = vmatprep.subr.bf16.mxu0 0
      %600 = vmatpush1.bf16.msra.mxu0 0
      %601 = vmatprep.subr.bf16.mxu0 0
      %602 = vmatpush1.bf16.msra.mxu0 0
      %603 = vmatprep.mubr.bf16.mxu0 0
      %604 = vmatmul.mubr.bf16.gmra.mrb[0].mxu0 %v520
      %v605 = vpop.f32.mrb[0].mxu0
      %v606 = vadd.f32 0.0, %v605
      %v607 = vpop.f32.mrb[0].mxu0
      %v608 = vpop.f32.mrb[0].mxu0
      %v609 = vadd.f32 0.0, %v608
      %v610 = vpop.f32.mrb[0].mxu0
      %611 = vmatprep.mubr.bf16.mxu0 0
      %612 = vmatmul.mubr.bf16.gmra.mrb[0].mxu0 %v523
      %v613 = vpop.f32.mrb[0].mxu0
      %v614 = vadd.f32 0.0, %v613
      %v615 = vpop.f32.mrb[0].mxu0
      %v616 = vpop.f32.mrb[0].mxu0
      %v617 = vadd.f32 0.0, %v616
      %v618 = vpop.f32.mrb[0].mxu0
      %619 = vmatprep.mubr.bf16.mxu0 0
      %620 = vmatmul.mubr.bf16.gmra.mrb[0].mxu0 %v526
      %v621 = vpop.f32.mrb[0].mxu0
      %v622 = vadd.f32 0.0, %v621
      %v623 = vpop.f32.mrb[0].mxu0
      %v624 = vpop.f32.mrb[0].mxu0
      %v625 = vadd.f32 0.0, %v624
      %v626 = vpop.f32.mrb[0].mxu0
      %627 = vmatprep.mubr.bf16.mxu0 0
      %628 = vmatmul.mubr.bf16.gmra.mrb[0].mxu0 %v529
      %v629 = vpop.f32.mrb[0].mxu0
      %v630 = vadd.f32 0.0, %v629
      %v631 = vpop.f32.mrb[0].mxu0
      %v632 = vpop.f32.mrb[0].mxu0
      %v633 = vadd.f32 0.0, %v632
      %v634 = vpop.f32.mrb[0].mxu0
      %635 = vmatprep.mubr.bf16.mxu0 0
      %636 = vmatmul.mubr.bf16.gmra.mrb[0].mxu0 %v532
      %v637 = vpop.f32.mrb[0].mxu0
      %v638 = vadd.f32 0.0, %v637
      %v639 = vpop.f32.mrb[0].mxu0
      %v640 = vpop.f32.mrb[0].mxu0
      %v641 = vadd.f32 0.0, %v640
      %v642 = vpop.f32.mrb[0].mxu0
      %643 = vmatprep.mubr.bf16.mxu0 0
      %644 = vmatmul.mubr.bf16.gmra.mrb[0].mxu0 %v535
      %v645 = vpop.f32.mrb[0].mxu0
      %v646 = vadd.f32 0.0, %v645
      %v647 = vpop.f32.mrb[0].mxu0
      %v648 = vpop.f32.mrb[0].mxu0
      %v649 = vadd.f32 0.0, %v648
      %v650 = vpop.f32.mrb[0].mxu0
      %651 = vmatprep.mubr.bf16.mxu0 0
      %652 = vmatmul.mubr.bf16.gmra.mrb[0].mxu0 %v538
      %v653 = vpop.f32.mrb[0].mxu0
      %v654 = vadd.f32 0.0, %v653
      %v655 = vpop.f32.mrb[0].mxu0
      %v656 = vpop.f32.mrb[0].mxu0
      %v657 = vadd.f32 0.0, %v656
      %v658 = vpop.f32.mrb[0].mxu0
      %659 = vmatprep.mubr.bf16.mxu0 0
      %660 = vmatmul.mubr.bf16.gmra.mrb[0].mxu0 %v541
      %v661 = vpop.f32.mrb[0].mxu0
      %v662 = vadd.f32 0.0, %v661
      %v663 = vpop.f32.mrb[0].mxu0
      %v664 = vpop.f32.mrb[0].mxu0
      %v665 = vadd.f32 0.0, %v664
      %v666 = vpop.f32.mrb[0].mxu0
      %667 = vmatprep.mubr.bf16.mxu0 0
      %668 = vmatmul.mubr.bf16.gmra.mrb[0].mxu0 %v544
      %v669 = vpop.f32.mrb[0].mxu0
      %v670 = vadd.f32 0.0, %v669
      %v671 = vpop.f32.mrb[0].mxu0
      %v672 = vpop.f32.mrb[0].mxu0
      %v673 = vadd.f32 0.0, %v672
      %v674 = vpop.f32.mrb[0].mxu0
      %675 = vmatprep.mubr.bf16.mxu0 0
      %676 = vmatmul.mubr.bf16.gmra.mrb[0].mxu0 %v547
      %v677 = vpop.f32.mrb[0].mxu0
      %v678 = vadd.f32 0.0, %v677
      %v679 = vpop.f32.mrb[0].mxu0
      %v680 = vpop.f32.mrb[0].mxu0
      %v681 = vadd.f32 0.0, %v680
      %v682 = vpop.f32.mrb[0].mxu0
      %683 = vmatprep.mubr.bf16.mxu0 0
      %684 = vmatmul.mubr.bf16.gmra.mrb[0].mxu0 %v550
      %v685 = vpop.f32.mrb[0].mxu0
      %v686 = vadd.f32 0.0, %v685
      %v687 = vpop.f32.mrb[0].mxu0
      %v688 = vpop.f32.mrb[0].mxu0
      %v689 = vadd.f32 0.0, %v688
      %v690 = vpop.f32.mrb[0].mxu0
      %691 = vmatprep.mubr.bf16.mxu0 0
      %692 = vmatmul.mubr.bf16.gmra.mrb[0].mxu0 %v553
      %v693 = vpop.f32.mrb[0].mxu0
      %v694 = vadd.f32 0.0, %v693
      %v695 = vpop.f32.mrb[0].mxu0
      %v696 = vpop.f32.mrb[0].mxu0
      %v697 = vadd.f32 0.0, %v696
      %v698 = vpop.f32.mrb[0].mxu0
      %699 = vmatprep.mubr.bf16.mxu0 0
      %700 = vmatmul.mubr.bf16.gmra.mrb[0].mxu0 %v556
      %v701 = vpop.f32.mrb[0].mxu0
      %v702 = vadd.f32 0.0, %v701
      %v703 = vpop.f32.mrb[0].mxu0
      %v704 = vpop.f32.mrb[0].mxu0
      %v705 = vadd.f32 0.0, %v704
      %v706 = vpop.f32.mrb[0].mxu0
      %707 = vmatprep.mubr.bf16.mxu0 0
      %708 = vmatmul.mubr.bf16.gmra.mrb[0].mxu0 %v559
      %v709 = vpop.f32.mrb[0].mxu0
      %v710 = vadd.f32 0.0, %v709
      %v711 = vpop.f32.mrb[0].mxu0
      %v712 = vpop.f32.mrb[0].mxu0
      %v713 = vadd.f32 0.0, %v712
      %v714 = vpop.f32.mrb[0].mxu0
      %715 = vmatprep.mubr.bf16.mxu0 0
      %716 = vmatmul.mubr.bf16.gmra.mrb[0].mxu0 %v562
      %v717 = vpop.f32.mrb[0].mxu0
      %v718 = vadd.f32 0.0, %v717
      %v719 = vpop.f32.mrb[0].mxu0
      %v720 = vpop.f32.mrb[0].mxu0
      %v721 = vadd.f32 0.0, %v720
      %v722 = vpop.f32.mrb[0].mxu0
      %723 = vmatprep.mubr.bf16.mxu0 0
      %724 = vmatmul.mubr.bf16.gmra.mrb[0].mxu0 %v565
      %v725 = vpop.f32.mrb[0].mxu0
      %v726 = vadd.f32 0.0, %v725
      %v727 = vpop.f32.mrb[0].mxu0
      %v728 = vpop.f32.mrb[0].mxu0
      %v729 = vadd.f32 0.0, %v728
      %v730 = vpop.f32.mrb[0].mxu0
      %731 = vdwg.mxu0
      %v732 = vadd.f32 %v338, %v606
      %v733 = vadd.f32 %v339, %v609
      %v734 = vadd.f32 %v340, %v614
      %v735 = vadd.f32 %v341, %v617
      %v736 = vadd.f32 %v342, %v622
      %v737 = vadd.f32 %v343, %v625
      %v738 = vadd.f32 %v344, %v630
      %v739 = vadd.f32 %v345, %v633
      %v740 = vadd.f32 %v346, %v638
      %v741 = vadd.f32 %v347, %v641
      %v742 = vadd.f32 %v348, %v646
      %v743 = vadd.f32 %v349, %v649
      %v744 = vadd.f32 %v350, %v654
      %v745 = vadd.f32 %v351, %v657
      %v746 = vadd.f32 %v352, %v662
      %v747 = vadd.f32 %v353, %v665
      %v748 = vadd.f32 %v354, %v670
      %v749 = vadd.f32 %v355, %v673
      %v750 = vadd.f32 %v356, %v678
      %v751 = vadd.f32 %v357, %v681
      %v752 = vadd.f32 %v358, %v686
      %v753 = vadd.f32 %v359, %v689
      %v754 = vadd.f32 %v360, %v694
      %v755 = vadd.f32 %v361, %v697
      %v756 = vadd.f32 %v362, %v702
      %v757 = vadd.f32 %v363, %v705
      %v758 = vadd.f32 %v364, %v710
      %v759 = vadd.f32 %v365, %v713
      %v760 = vadd.f32 %v366, %v718
      %v761 = vadd.f32 %v367, %v721
      %v762 = vadd.f32 %v368, %v726
      %v763 = vadd.f32 %v369, %v729
      %vm764 = vcmask 31744
      %765 = vst.msk [vmem:[#allocation2] sm:$0xff] %vm764, %v732
      %766 = vst.msk [vmem:[#allocation2 + $0x8] sm:$0xff] %vm764, %v733
      %767 = vst.msk [vmem:[#allocation2 + $0x10] sm:$0xff] %vm764, %v734
      %768 = vst.msk [vmem:[#allocation2 + $0x18] sm:$0xff] %vm764, %v735
      %769 = vst.msk [vmem:[#allocation2 + $0x20] sm:$0xff] %vm764, %v736
      %770 = vst.msk [vmem:[#allocation2 + $0x28] sm:$0xff] %vm764, %v737
      %771 = vst.msk [vmem:[#allocation2 + $0x30] sm:$0xff] %vm764, %v738
      %772 = vst.msk [vmem:[#allocation2 + $0x38] sm:$0xff] %vm764, %v739
      %773 = vst.msk [vmem:[#allocation2 + $0x40] sm:$0xff] %vm764, %v740
      %774 = vst.msk [vmem:[#allocation2 + $0x48] sm:$0xff] %vm764, %v741
      %775 = vst.msk [vmem:[#allocation2 + $0x50] sm:$0xff] %vm764, %v742
      %776 = vst.msk [vmem:[#allocation2 + $0x58] sm:$0xff] %vm764, %v743
      %777 = vst.msk [vmem:[#allocation2 + $0x60] sm:$0xff] %vm764, %v744
      %778 = vst.msk [vmem:[#allocation2 + $0x68] sm:$0xff] %vm764, %v745
      %779 = vst.msk [vmem:[#allocation2 + $0x70] sm:$0xff] %vm764, %v746
      %780 = vst.msk [vmem:[#allocation2 + $0x78] sm:$0xff] %vm764, %v747
      %781 = vst.msk [vmem:[#allocation2 + $0x80] sm:$0xff] %vm764, %v748
      %782 = vst.msk [vmem:[#allocation2 + $0x88] sm:$0xff] %vm764, %v749
      %783 = vst.msk [vmem:[#allocation2 + $0x90] sm:$0xff] %vm764, %v750
      %784 = vst.msk [vmem:[#allocation2 + $0x98] sm:$0xff] %vm764, %v751
      %785 = vst.msk [vmem:[#allocation2 + $0xa0] sm:$0xff] %vm764, %v752
      %786 = vst.msk [vmem:[#allocation2 + $0xa8] sm:$0xff] %vm764, %v753
      %787 = vst.msk [vmem:[#allocation2 + $0xb0] sm:$0xff] %vm764, %v754
      %788 = vst.msk [vmem:[#allocation2 + $0xb8] sm:$0xff] %vm764, %v755
      %789 = vst.msk [vmem:[#allocation2 + $0xc0] sm:$0xff] %vm764, %v756
      %790 = vst.msk [vmem:[#allocation2 + $0xc8] sm:$0xff] %vm764, %v757
      %791 = vst.msk [vmem:[#allocation2 + $0xd0] sm:$0xff] %vm764, %v758
      %792 = vst.msk [vmem:[#allocation2 + $0xd8] sm:$0xff] %vm764, %v759
      %793 = vst.msk [vmem:[#allocation2 + $0xe0] sm:$0xff] %vm764, %v760
      %794 = vst.msk [vmem:[#allocation2 + $0xe8] sm:$0xff] %vm764, %v761
      %795 = vst.msk [vmem:[#allocation2 + $0xf0] sm:$0xff] %vm764, %v762
      %796 = vst.msk [vmem:[#allocation2 + $0xf8] sm:$0xff] %vm764, %v763
      // Predicated region
      $region41: #{two_conv_block_forward.3} parent=35 // pred_check
        %p797 = pneg %p301
      $region42: #{two_conv_block_forward.3} parent=35 // pred_check_branch
        %799 = sbr.rel (%p797) target = $region44
      $region43: #{two_conv_block_forward.3} parent=35 // pred_region
        %v800 = vld [vmem:[#allocation2] sm:$0xff]
        %v801 = vld [vmem:[#allocation2 + $0x8] sm:$0xff]
        %v802 = vld [vmem:[#allocation2 + $0x10] sm:$0xff]
        %v803 = vld [vmem:[#allocation2 + $0x18] sm:$0xff]
        %v804 = vld [vmem:[#allocation2 + $0x20] sm:$0xff]
        %v805 = vld [vmem:[#allocation2 + $0x28] sm:$0xff]
        %v806 = vld [vmem:[#allocation2 + $0x30] sm:$0xff]
        %v807 = vld [vmem:[#allocation2 + $0x38] sm:$0xff]
        %v808 = vld [vmem:[#allocation2 + $0x40] sm:$0xff]
        %v809 = vld [vmem:[#allocation2 + $0x48] sm:$0xff]
        %v810 = vld [vmem:[#allocation2 + $0x50] sm:$0xff]
        %v811 = vld [vmem:[#allocation2 + $0x58] sm:$0xff]
        %v812 = vld [vmem:[#allocation2 + $0x60] sm:$0xff]
        %v813 = vld [vmem:[#allocation2 + $0x68] sm:$0xff]
        %v814 = vld [vmem:[#allocation2 + $0x70] sm:$0xff]
        %v815 = vld [vmem:[#allocation2 + $0x78] sm:$0xff]
        %v816 = vld [vmem:[#allocation2 + $0x80] sm:$0xff]
        %v817 = vld [vmem:[#allocation2 + $0x88] sm:$0xff]
        %v818 = vld [vmem:[#allocation2 + $0x90] sm:$0xff]
        %v819 = vld [vmem:[#allocation2 + $0x98] sm:$0xff]
        %v820 = vld [vmem:[#allocation2 + $0xa0] sm:$0xff]
        %v821 = vld [vmem:[#allocation2 + $0xa8] sm:$0xff]
        %v822 = vld [vmem:[#allocation2 + $0xb0] sm:$0xff]
        %v823 = vld [vmem:[#allocation2 + $0xb8] sm:$0xff]
        %v824 = vld [vmem:[#allocation2 + $0xc0] sm:$0xff]
        %v825 = vld [vmem:[#allocation2 + $0xc8] sm:$0xff]
        %v826 = vld [vmem:[#allocation2 + $0xd0] sm:$0xff]
        %v827 = vld [vmem:[#allocation2 + $0xd8] sm:$0xff]
        %v828 = vld [vmem:[#allocation2 + $0xe0] sm:$0xff]
        %v829 = vld [vmem:[#allocation2 + $0xe8] sm:$0xff]
        %v830 = vld [vmem:[#allocation2 + $0xf0] sm:$0xff]
        %v831 = vld [vmem:[#allocation2 + $0xf8] sm:$0xff]
        %v832 = vld [vmem:[%s287] sm:$0x1]
        %v834 = vlaneseq
        %v835 = vshrl.u32 %v834, 7
        %v836 = vsub.s32 0, %v835
        %v837 = vrot.slane %v832, %v836
        %v839 = vmul.f32 %v800, %v837
        %v840 = vmul.f32 %v801, %v837
        %v841 = vmul.f32 %v802, %v837
        %v842 = vmul.f32 %v803, %v837
        %v843 = vmul.f32 %v804, %v837
        %v844 = vmul.f32 %v805, %v837
        %v845 = vmul.f32 %v806, %v837
        %v846 = vmul.f32 %v807, %v837
        %v847 = vmul.f32 %v808, %v837
        %v848 = vmul.f32 %v809, %v837
        %v849 = vmul.f32 %v810, %v837
        %v850 = vmul.f32 %v811, %v837
        %v851 = vmul.f32 %v812, %v837
        %v852 = vmul.f32 %v813, %v837
        %v853 = vmul.f32 %v814, %v837
        %v854 = vmul.f32 %v815, %v837
        %v855 = vmul.f32 %v816, %v837
        %v856 = vmul.f32 %v817, %v837
        %v857 = vmul.f32 %v818, %v837
        %v858 = vmul.f32 %v819, %v837
        %v859 = vmul.f32 %v820, %v837
        %v860 = vmul.f32 %v821, %v837
        %v861 = vmul.f32 %v822, %v837
        %v862 = vmul.f32 %v823, %v837
        %v863 = vmul.f32 %v824, %v837
        %v864 = vmul.f32 %v825, %v837
        %v865 = vmul.f32 %v826, %v837
        %v866 = vmul.f32 %v827, %v837
        %v867 = vmul.f32 %v828, %v837
        %v868 = vmul.f32 %v829, %v837
        %v869 = vmul.f32 %v830, %v837
        %v870 = vmul.f32 %v831, %v837
        %v871 = vld [vmem:[%s290] sm:$0x1]
        %v873 = vlaneseq
        %v874 = vshrl.u32 %v873, 7
        %v875 = vsub.s32 0, %v874
        %v876 = vrot.slane %v871, %v875
        %v878 = vadd.f32 %v839, %v876
        %v879 = vadd.f32 %v840, %v876
        %v880 = vadd.f32 %v841, %v876
        %v881 = vadd.f32 %v842, %v876
        %v882 = vadd.f32 %v843, %v876
        %v883 = vadd.f32 %v844, %v876
        %v884 = vadd.f32 %v845, %v876
        %v885 = vadd.f32 %v846, %v876
        %v886 = vadd.f32 %v847, %v876
        %v887 = vadd.f32 %v848, %v876
        %v888 = vadd.f32 %v849, %v876
        %v889 = vadd.f32 %v850, %v876
        %v890 = vadd.f32 %v851, %v876
        %v891 = vadd.f32 %v852, %v876
        %v892 = vadd.f32 %v853, %v876
        %v893 = vadd.f32 %v854, %v876
        %v894 = vadd.f32 %v855, %v876
        %v895 = vadd.f32 %v856, %v876
        %v896 = vadd.f32 %v857, %v876
        %v897 = vadd.f32 %v858, %v876
        %v898 = vadd.f32 %v859, %v876
        %v899 = vadd.f32 %v860, %v876
        %v900 = vadd.f32 %v861, %v876
        %v901 = vadd.f32 %v862, %v876
        %v902 = vadd.f32 %v863, %v876
        %v903 = vadd.f32 %v864, %v876
        %v904 = vadd.f32 %v865, %v876
        %v905 = vadd.f32 %v866, %v876
        %v906 = vadd.f32 %v867, %v876
        %v907 = vadd.f32 %v868, %v876
        %v908 = vadd.f32 %v869, %v876
        %v909 = vadd.f32 %v870, %v876
        %v910 = vmax.f32 %v878, 0.0
        %v911 = vmax.f32 %v879, 0.0
        %v912 = vmax.f32 %v880, 0.0
        %v913 = vmax.f32 %v881, 0.0
        %v914 = vmax.f32 %v882, 0.0
        %v915 = vmax.f32 %v883, 0.0
        %v916 = vmax.f32 %v884, 0.0
        %v917 = vmax.f32 %v885, 0.0
        %v918 = vmax.f32 %v886, 0.0
        %v919 = vmax.f32 %v887, 0.0
        %v920 = vmax.f32 %v888, 0.0
        %v921 = vmax.f32 %v889, 0.0
        %v922 = vmax.f32 %v890, 0.0
        %v923 = vmax.f32 %v891, 0.0
        %v924 = vmax.f32 %v892, 0.0
        %v925 = vmax.f32 %v893, 0.0
        %v926 = vmax.f32 %v894, 0.0
        %v927 = vmax.f32 %v895, 0.0
        %v928 = vmax.f32 %v896, 0.0
        %v929 = vmax.f32 %v897, 0.0
        %v930 = vmax.f32 %v898, 0.0
        %v931 = vmax.f32 %v899, 0.0
        %v932 = vmax.f32 %v900, 0.0
        %v933 = vmax.f32 %v901, 0.0
        %v934 = vmax.f32 %v902, 0.0
        %v935 = vmax.f32 %v903, 0.0
        %v936 = vmax.f32 %v904, 0.0
        %v937 = vmax.f32 %v905, 0.0
        %v938 = vmax.f32 %v906, 0.0
        %v939 = vmax.f32 %v907, 0.0
        %v940 = vmax.f32 %v908, 0.0
        %v941 = vmax.f32 %v909, 0.0
        %942 = vst.msk [vmem:[%s298] sm:$0xff] %vm764, %v910
        %943 = vst.msk [vmem:[%s298 + $0x8] sm:$0xff] %vm764, %v911
        %944 = vst.msk [vmem:[%s298 + $0x10] sm:$0xff] %vm764, %v912
        %945 = vst.msk [vmem:[%s298 + $0x18] sm:$0xff] %vm764, %v913
        %946 = vst.msk [vmem:[%s298 + $0x20] sm:$0xff] %vm764, %v914
        %947 = vst.msk [vmem:[%s298 + $0x28] sm:$0xff] %vm764, %v915
        %948 = vst.msk [vmem:[%s298 + $0x30] sm:$0xff] %vm764, %v916
        %949 = vst.msk [vmem:[%s298 + $0x38] sm:$0xff] %vm764, %v917
        %950 = vst.msk [vmem:[%s298 + $0x40] sm:$0xff] %vm764, %v918
        %951 = vst.msk [vmem:[%s298 + $0x48] sm:$0xff] %vm764, %v919
        %952 = vst.msk [vmem:[%s298 + $0x50] sm:$0xff] %vm764, %v920
        %953 = vst.msk [vmem:[%s298 + $0x58] sm:$0xff] %vm764, %v921
        %954 = vst.msk [vmem:[%s298 + $0x60] sm:$0xff] %vm764, %v922
        %955 = vst.msk [vmem:[%s298 + $0x68] sm:$0xff] %vm764, %v923
        %956 = vst.msk [vmem:[%s298 + $0x70] sm:$0xff] %vm764, %v924
        %957 = vst.msk [vmem:[%s298 + $0x78] sm:$0xff] %vm764, %v925
        %958 = vst.msk [vmem:[%s298 + $0x80] sm:$0xff] %vm764, %v926
        %959 = vst.msk [vmem:[%s298 + $0x88] sm:$0xff] %vm764, %v927
        %960 = vst.msk [vmem:[%s298 + $0x90] sm:$0xff] %vm764, %v928
        %961 = vst.msk [vmem:[%s298 + $0x98] sm:$0xff] %vm764, %v929
        %962 = vst.msk [vmem:[%s298 + $0xa0] sm:$0xff] %vm764, %v930
        %963 = vst.msk [vmem:[%s298 + $0xa8] sm:$0xff] %vm764, %v931
        %964 = vst.msk [vmem:[%s298 + $0xb0] sm:$0xff] %vm764, %v932
        %965 = vst.msk [vmem:[%s298 + $0xb8] sm:$0xff] %vm764, %v933
        %966 = vst.msk [vmem:[%s298 + $0xc0] sm:$0xff] %vm764, %v934
        %967 = vst.msk [vmem:[%s298 + $0xc8] sm:$0xff] %vm764, %v935
        %968 = vst.msk [vmem:[%s298 + $0xd0] sm:$0xff] %vm764, %v936
        %969 = vst.msk [vmem:[%s298 + $0xd8] sm:$0xff] %vm764, %v937
        %970 = vst.msk [vmem:[%s298 + $0xe0] sm:$0xff] %vm764, %v938
        %971 = vst.msk [vmem:[%s298 + $0xe8] sm:$0xff] %vm764, %v939
        %972 = vst.msk [vmem:[%s298 + $0xf0] sm:$0xff] %vm764, %v940
        %973 = vst.msk [vmem:[%s298 + $0xf8] sm:$0xff] %vm764, %v941
      $region44: #{two_conv_block_forward.3} parent=35 // pred_fallthru
        _
      %s974 = smul.u32 32, %s20
      %p975 = scmp.lt.s32.totalorder %s974, 63
      %s976 = scalar_select %p975, %s974, 63
      %p977 = scmp.lt.s32.totalorder %s21, 0
      %s978 = scalar_select %p977, %s21, 0
      %s979 = sadd.s32 %s978, %s976
      %s980 = smul.addr %s979, 8
      %s981 = scalar_lea.vmem %s4, %s980
      // Predicated region
      $region45: #{two_conv_block_forward.3} parent=35 // pred_check
        %p982 = pneg %p162
      $region46: #{two_conv_block_forward.3} parent=35 // pred_check_branch
        %984 = sbr.rel (%p982) target = $region48
      $region47: #{two_conv_block_forward.3} parent=35 // pred_region
        %s985 = smul.u32 32, %s20
      $region48: #{two_conv_block_forward.3} parent=35 // pred_fallthru
        _
    $region36: #{two_conv_block_forward.3} parent=5 // pred_fallthru
      _
    %p986 = scmp.le.s32.totalorder 2, %s10
    // Predicated region
    $region49: #{two_conv_block_forward.3} parent=5 // pred_check
      %p987 = pneg %p986
    $region50: #{two_conv_block_forward.3} parent=5 // pred_check_branch
      %989 = sbr.rel (%p987) target = $region52
    $region51: #{two_conv_block_forward.3} parent=5 // pred_region
      %s990 = ssub.s32 %s10, 2
      // Predicated region
      $region53: #{two_conv_block_forward.3} parent=51 // pred_check
        %p991 = pneg %p168
      $region54: #{two_conv_block_forward.3} parent=51 // pred_check_branch
        %993 = sbr.rel (%p991) target = $region56
      $region55: #{two_conv_block_forward.3} parent=51 // pred_region
        %s994 = smul.u32 32, %s23
        %p995 = scmp.lt.s32.totalorder %s994, 63
        %s996 = scalar_select %p995, %s994, 63
        %p997 = scmp.lt.s32.totalorder %s24, 0
        %s998 = scalar_select %p997, %s24, 0
        %s999 = sadd.s32 %s998, %s996
        %s1000 = smul.addr %s999, 8
        %s1001 = scalar_lea.vmem %s4, %s1000
      $region56: #{two_conv_block_forward.3} parent=51 // pred_fallthru
        _
    $region52: #{two_conv_block_forward.3} parent=5 // pred_fallthru
      _
  $region6: #{two_conv_block_forward.3} parent=0 // loop_footer
    %s14 = sadd.s32 1, %s10
  $region7: #{two_conv_block_forward.3} parent=0 // loop_footer_branch
    %9 = sbr.rel target = $region3
  $region8: #{two_conv_block_forward.3} parent=0 // loop_exit
    _

</llo_original>
